<compile_context>
chip_gen: v7x
topology: tpu7x:2x2x1
jax: 0.10.0
libtpu: 0.0.40
codegen_flags: <defaults>
</compile_context>

<pallas_src>
import functools
import math

import jax
import jax.numpy as jnp
from jax.experimental import pallas as pl
from jax.experimental.pallas import tpu as pltpu

_NEG_INF = -1e9  # additive mask for padded key columns


def _swin_attention_kernel(x_ref, wq_ref, wk_ref, wv_ref, bq_ref, bk_ref, bv_ref,
                           bias_ref, o_ref, *, num_heads, windows, seq,
                           use_bf16_mxu, approx_recip):
    """Fused window attention for `windows` windows (one grid step).

    x_ref    : (windows*seq, C)   hidden states, rows ordered (window, token)
    w*_ref   : (C, C)             Q/K/V weights, transposed (out = x @ W);
                                  1/sqrt(Dh) is already folded into wq / bq.
    b*_ref   : (1, C)             Q/K/V biases
    bias_ref : (H, nb, seq, seq)  rel-pos bias (+ window mask), nb in {1, windows}
    o_ref    : (windows*seq, C)   context layer
    """
    rows, channels = x_ref.shape
    head_dim = channels // num_heads
    f32 = jnp.float32
    mxu = jnp.bfloat16 if use_bf16_mxu else f32

    xm = x_ref[...].astype(mxu)

    def proj(w_ref, b_ref):
        # Full-width projection keeps the MXU N-dimension dense.
        y = jnp.dot(xm, w_ref[...].astype(mxu), preferred_element_type=f32)
        return y + b_ref[...].astype(f32)

    q = proj(wq_ref, bq_ref)       # scale pre-folded into wq / bq
    k = proj(wk_ref, bk_ref)
    v = proj(wv_ref, bv_ref)

    def split_heads(t):
        # (rows, C) -> (H*windows, seq, Dh); batch order = (head major, window minor)
        heads = [t[:, h * head_dim:(h + 1) * head_dim].reshape(windows, seq, head_dim)
                 for h in range(num_heads)]
        return jnp.stack(heads, axis=0).reshape(num_heads * windows, seq, head_dim)

    qh = split_heads(q).astype(mxu)
    kh = split_heads(k).astype(mxu)
    vh = split_heads(v).astype(mxu)

    # Scores for every (head, window) pair in one batched MXU call.
    s = jnp.einsum('bsd,btd->bst', qh, kh, preferred_element_type=f32)
    s = (s.reshape(num_heads, windows, seq, seq) + bias_ref[...].astype(f32)
         ).reshape(num_heads * windows, seq, seq)

    # Numerically-stable softmax; statistics in f32.  Normalization is folded
    # into the (much smaller) context tensor after the PV matmul.
    m = jnp.max(s, axis=-1, keepdims=True)
    p = jnp.exp(s - m)
    denom = jnp.sum(p, axis=-1, keepdims=True)

    ctx = jnp.einsum('bst,btd->bsd', p.astype(mxu), vh, preferred_element_type=f32)
    ctx = ctx * pl.reciprocal(denom, approx=approx_recip)

    # Re-merge heads along channels; single lane-dense store.
    ctx = ctx.reshape(num_heads, windows, seq, head_dim)
    merged = jnp.concatenate(
        [ctx[h].reshape(rows, head_dim) for h in range(num_heads)], axis=-1)
    o_ref[...] = merged.astype(o_ref.dtype)


def _vmem_capacity_bytes():
    try:
        return int(pltpu.get_tpu_info().vmem_capacity_bytes)
    except Exception:
        return 64 * 1024 * 1024     # conservative (v7x-sized) default


def _pick_window_batch(batch, period, seq_pad, row_target, fits):
    """Largest divisor of `period` fitting VMEM; prefer >=2 (even) grid steps."""
    cands = [d for d in range(1, period + 1) if period % d == 0 and fits(d)]
    if not cands:
        cands = [1]

    def key(d):
        grid = batch // d
        return (grid >= 2,                                   # keep both v7x TCs busy
                d * seq_pad <= max(row_target, seq_pad),     # stay near the row target
                grid >= 2 and grid % 2 == 0,                 # balanced megacore split
                d)                                           # then largest block
    return max(cands, key=key)


def swin_self_attention(hidden_states, wq, bq, wk, bk, wv, bv,
                        rel_pos_bias_table, rel_pos_index, num_heads,
                        attention_mask=None, *, mxu_bf16=None):
    """Pallas implementation of SwinSelfAttention.forward (context layer only).

    hidden_states: (B, S, C) with B = batch * num_windows, S = window area
    wq/wk/wv:      (C, C) transposed nn.Linear weights (out = x @ W)
    bq/bk/bv:      (C,)
    rel_pos_bias_table: ((2*Wh-1)*(2*Ww-1), num_heads)
    rel_pos_index: (S, S) int
    attention_mask: optional (num_windows, S, S) additive mask
    mxu_bf16: feed bf16 operands to the MXU (f32 accumulate / f32 softmax);
              None = auto (bf16 only when hidden_states is bf16).
    """
    # TODO(synk): attention-probs dropout, head_mask and output_attentions of
    # the HF module are not implemented (inference defaults: None / False).
    batch, seq, channels = hidden_states.shape
    assert channels % num_heads == 0
    head_dim = channels // num_heads
    scale = 1.0 / math.sqrt(head_dim)

    use_bf16 = (hidden_states.dtype == jnp.bfloat16) if mxu_bf16 is None else bool(mxu_bf16)
    w_dtype = jnp.bfloat16 if use_bf16 else jnp.float32

    # Tiny parameter-side gather: table -> (H, S, S).
    rel_bias = rel_pos_bias_table[rel_pos_index.reshape(-1)]
    rel_bias = rel_bias.reshape(seq, seq, num_heads).transpose(2, 0, 1).astype(jnp.float32)

    if attention_mask is None:
        bias = rel_bias[:, None, :, :]                                   # (H, 1, S, S)
        nb = 1
    else:
        nb = attention_mask.shape[0]
        assert batch % nb == 0, "batch must be a multiple of num_windows"
        bias = (rel_bias[:, None, :, :]
                + attention_mask.astype(jnp.float32)[None, :, :, :])     # (H, nw, S, S)

    # Pad window length to a sublane multiple (e.g. 49 -> 56): every block /
    # reshape stays (8,128)-friendly.  Padded keys are masked, padded query
    # rows are dropped on output.
    seq_pad = ((seq + 7) // 8) * 8
    x = hidden_states
    if seq_pad != seq:
        pad = seq_pad - seq
        x = jnp.pad(x, ((0, 0), (0, pad), (0, 0)))
        bias = jnp.pad(bias, ((0, 0), (0, 0), (0, pad), (0, 0)))
        bias = jnp.pad(bias, ((0, 0), (0, 0), (0, 0), (0, pad)),
                       constant_values=_NEG_INF)
    x2d = x.reshape(batch * seq_pad, channels)

    # Fold 1/sqrt(Dh) into Wq / bq (free, parameter-sized).
    wq_s = (wq * scale).astype(w_dtype)
    wk_s = wk.astype(w_dtype)
    wv_s = wv.astype(w_dtype)
    bq2 = (bq * scale).reshape(1, channels).astype(jnp.float32)
    bk2 = bk.reshape(1, channels).astype(jnp.float32)
    bv2 = bv.reshape(1, channels).astype(jnp.float32)

    # ---- choose windows-per-step (wb) --------------------------------------
    cap = _vmem_capacity_bytes()
    vmem_limit = min(int(cap * 3 // 4), 100 * 1024 * 1024)
    row_target = 512 if cap <= 64 * 1024 * 1024 else 1024
    period = nb if attention_mask is not None else batch
    in_item = x2d.dtype.itemsize
    w_item = 2 if use_bf16 else 4
    weight_bytes = 3 * channels * channels * w_item + 3 * channels * 4

    def fits(d):
        rows = d * seq_pad
        nbk = d if attention_mask is not None else 1
        step = (2 * 2 * rows * channels * in_item                 # x / out blocks (2x buffered)
                + 8 * rows * channels * 4                         # q/k/v/ctx + head-layout copies
                + 2 * num_heads * d * seq_pad * seq_pad * 4       # scores + probs
                + 2 * num_heads * nbk * seq_pad * seq_pad * 4)    # bias block
        return step + weight_bytes <= vmem_limit // 2

    wb = _pick_window_batch(batch, period, seq_pad, row_target, fits)
    rows_per_step = wb * seq_pad
    nb_blk = wb if attention_mask is not None else 1
    grid = (batch // wb,)

    kernel = functools.partial(
        _swin_attention_kernel, num_heads=num_heads, windows=wb, seq=seq_pad,
        use_bf16_mxu=use_bf16, approx_recip=use_bf16)

    out_shape = jax.ShapeDtypeStruct((batch * seq_pad, channels), hidden_states.dtype)

    def build(use_buffered):
        def resident(shape):
            idx = lambda i: (0,) * len(shape)
            if use_buffered:
                # Constant index map -> single-buffered resident block (saves VMEM).
                return pl.BlockSpec(shape, idx, pipeline_mode=pl.Buffered(1))
            return pl.BlockSpec(shape, idx)

        if nb_blk == nb:
            bias_spec = resident((num_heads, nb, seq_pad, seq_pad))
        else:
            m = nb // nb_blk
            bias_spec = pl.BlockSpec((num_heads, nb_blk, seq_pad, seq_pad),
                                     lambda i: (0, i % m, 0, 0))

        in_specs = [
            pl.BlockSpec((rows_per_step, channels), lambda i: (i, 0)),
            resident((channels, channels)),
            resident((channels, channels)),
            resident((channels, channels)),
            resident((1, channels)),
            resident((1, channels)),
            resident((1, channels)),
            bias_spec,
        ]
        out_specs = pl.BlockSpec((rows_per_step, channels), lambda i: (i, 0))
        return pl.pallas_call(
            kernel,
            out_shape=out_shape,
            grid_spec=pltpu.PrefetchScalarGridSpec(
                num_scalar_prefetch=0, grid=grid,
                in_specs=in_specs, out_specs=out_specs),
            compiler_params=pltpu.CompilerParams(
                dimension_semantics=("parallel",),
                vmem_limit_bytes=vmem_limit))

    args = (x2d, wq_s, wk_s, wv_s, bq2, bk2, bv2, bias)
    try:
        out2d = build(True)(*args)
    except Exception:
        # pl.Buffered(1) not supported on this JAX version -> default buffering.
        out2d = build(False)(*args)

    out = out2d.reshape(batch, seq_pad, channels)
    if seq_pad != seq:
        out = out[:, :seq, :]
    return out


def _make_relative_position_index(window_size):
    """Matches the PyTorch buffer construction."""
    wh, ww = window_size
    coords = jnp.stack(jnp.meshgrid(jnp.arange(wh), jnp.arange(ww), indexing='ij'))
    coords_flat = coords.reshape(2, -1)
    rel = coords_flat[:, :, None] - coords_flat[:, None, :]
    rel = rel.transpose(1, 2, 0)
    rel = rel.at[:, :, 0].add(wh - 1)
    rel = rel.at[:, :, 1].add(ww - 1)
    rel = rel.at[:, :, 0].multiply(2 * ww - 1)
    return rel.sum(-1)                                                  # (S, S)


def _reference(hidden_states, wq, bq, wk, bk, wv, bv,
               rel_pos_bias_table, rel_pos_index, num_heads,
               attention_mask=None):
    """Pure-JAX reference mirroring the PyTorch module."""
    batch, seq, channels = hidden_states.shape
    head_dim = channels // num_heads
    x = hidden_states.astype(jnp.float32)

    def proj(w, b):
        y = x @ w.astype(jnp.float32) + b.astype(jnp.float32)
        return y.reshape(batch, seq, num_heads, head_dim).transpose(0, 2, 1, 3)

    q, k, v = proj(wq, bq), proj(wk, bk), proj(wv, bv)
    scores = jnp.einsum('bhsd,bhtd->bhst', q, k) / math.sqrt(head_dim)
    rel = rel_pos_bias_table[rel_pos_index.reshape(-1)]
    rel = rel.reshape(seq, seq, num_heads).transpose(2, 0, 1).astype(jnp.float32)
    scores = scores + rel[None]
    if attention_mask is not None:
        nw = attention_mask.shape[0]
        scores = scores.reshape(batch // nw, nw, num_heads, seq, seq)
        scores = scores + attention_mask.astype(jnp.float32)[None, :, None]
        scores = scores.reshape(batch, num_heads, seq, seq)
    probs = jax.nn.softmax(scores, axis=-1)
    ctx = jnp.einsum('bhst,bhtd->bhsd', probs, v)
    return ctx.transpose(0, 2, 1, 3).reshape(batch, seq, channels)


def _make_inputs(key, batch, window_size, num_heads, head_dim):
    seq = window_size[0] * window_size[1]
    channels = num_heads * head_dim
    ks = jax.random.split(key, 9)
    hidden = jax.random.normal(ks[0], (batch, seq, channels), jnp.float32)
    w_scale = 1.0 / math.sqrt(channels)
    wq = jax.random.normal(ks[1], (channels, channels), jnp.float32) * w_scale
    wk = jax.random.normal(ks[2], (channels, channels), jnp.float32) * w_scale
    wv = jax.random.normal(ks[3], (channels, channels), jnp.float32) * w_scale
    bq = 0.1 * jax.random.normal(ks[4], (channels,), jnp.float32)
    bk = 0.1 * jax.random.normal(ks[5], (channels,), jnp.float32)
    bv = 0.1 * jax.random.normal(ks[6], (channels,), jnp.float32)
    n_rel = (2 * window_size[0] - 1) * (2 * window_size[1] - 1)
    table = 0.5 * jax.random.normal(ks[7], (n_rel, num_heads), jnp.float32)
    index = _make_relative_position_index(window_size)
    return (hidden, wq, bq, wk, bk, wv, bv, table, index), ks[8]


if __name__ == "__main__":
    key = jax.random.PRNGKey(0)
    k1, k2, k3 = jax.random.split(key, 3)

    # Case 1: 4x4 window (S=16), H=2, C=32, batch=2, no mask.
    (a1, _) = _make_inputs(k1, batch=2, window_size=(4, 4), num_heads=2, head_dim=16)
    out1 = jax.block_until_ready(swin_self_attention(*a1, 2))
    ref1 = _reference(*a1, 2)
    assert out1.shape == a1[0].shape, out1.shape
    assert jnp.allclose(out1, ref1, atol=2e-3, rtol=2e-3), \
        float(jnp.max(jnp.abs(out1 - ref1)))

    # Case 2: shifted-window mask, num_windows=4, batch=4 (exercises blocked
    # bias index map with wb < num_windows).
    (a2, kmask) = _make_inputs(k2, batch=4, window_size=(4, 4), num_heads=2, head_dim=16)
    seq2 = a2[0].shape[1]
    mask = jnp.where(jax.random.uniform(kmask, (4, seq2, seq2)) > 0.7,
                     -100.0, 0.0).astype(jnp.float32)
    out2 = jax.block_until_ready(swin_self_attention(*a2, 2, attention_mask=mask))
    ref2 = _reference(*a2, 2, attention_mask=mask)
    assert jnp.allclose(out2, ref2, atol=2e-3, rtol=2e-3), \
        float(jnp.max(jnp.abs(out2 - ref2)))

    # Case 3: 3x3 window (S=9, not a multiple of 8) -> exercises padding path.
    (a3, _) = _make_inputs(k3, batch=4, window_size=(3, 3), num_heads=4, head_dim=8)
    out3 = jax.block_until_ready(swin_self_attention(*a3, 4))
    ref3 = _reference(*a3, 4)
    assert out3.shape == a3[0].shape, out3.shape
    assert jnp.allclose(out3, ref3, atol=2e-3, rtol=2e-3), \
        float(jnp.max(jnp.abs(out3 - ref3)))

    # Case 4: bf16 MXU operands (f32 accumulate / softmax) sanity check.
    out4 = jax.block_until_ready(swin_self_attention(*a1, 2, mxu_bf16=True))
    assert float(jnp.max(jnp.abs(out4 - ref1))) < 0.25

    print("KERNEL_OK")
</pallas_src>

<mosaic_0001>
module attributes {stable_mosaic.version = 11 : i64} {
  func.func @_swin_attention_kernel(%arg0: i32, %arg1: memref<16x32xf32, #tpu.memory_space<vmem>>, %arg2: memref<32x32xf32, #tpu.memory_space<vmem>>, %arg3: memref<32x32xf32, #tpu.memory_space<vmem>>, %arg4: memref<32x32xf32, #tpu.memory_space<vmem>>, %arg5: memref<1x32xf32, #tpu.memory_space<vmem>>, %arg6: memref<1x32xf32, #tpu.memory_space<vmem>>, %arg7: memref<1x32xf32, #tpu.memory_space<vmem>>, %arg8: memref<2x1x16x16xf32, #tpu.memory_space<vmem>>, %arg9: memref<16x32xf32, #tpu.memory_space<vmem>>) attributes {dimension_semantics = [#tpu.dimension_semantics<parallel>], iteration_bounds = array<i64: 2>, scalar_prefetch = 0 : i64, scratch_operands = 0 : i64, tpu.core_type = #tpu.core_type<tc>, window_params = [{transform_indices = @transform_0, window_bounds = array<i64: 16, 32>}, {pipeline_mode = #tpu.pipeline_mode<synchronous>, transform_indices = @transform_1, window_bounds = array<i64: 32, 32>}, {pipeline_mode = #tpu.pipeline_mode<synchronous>, transform_indices = @transform_2, window_bounds = array<i64: 32, 32>}, {pipeline_mode = #tpu.pipeline_mode<synchronous>, transform_indices = @transform_3, window_bounds = array<i64: 32, 32>}, {pipeline_mode = #tpu.pipeline_mode<synchronous>, transform_indices = @transform_4, window_bounds = array<i64: 1, 32>}, {pipeline_mode = #tpu.pipeline_mode<synchronous>, transform_indices = @transform_5, window_bounds = array<i64: 1, 32>}, {pipeline_mode = #tpu.pipeline_mode<synchronous>, transform_indices = @transform_6, window_bounds = array<i64: 1, 32>}, {pipeline_mode = #tpu.pipeline_mode<synchronous>, transform_indices = @transform_7, window_bounds = array<i64: 2, 1, 16, 16>}, {transform_indices = @transform_8, window_bounds = array<i64: 16, 32>}]} {
    %c0 = arith.constant 0 : index
    %c0_0 = arith.constant 0 : index
    %0 = vector.load %arg1[%c0, %c0_0] : memref<16x32xf32, #tpu.memory_space<vmem>>, vector<16x32xf32>
    %c0_1 = arith.constant 0 : index
    %c0_2 = arith.constant 0 : index
    %1 = vector.load %arg2[%c0_1, %c0_2] : memref<32x32xf32, #tpu.memory_space<vmem>>, vector<32x32xf32>
    %cst = arith.constant dense<0.000000e+00> : vector<16x32xf32>
    %2 = tpu.matmul %0, %1, %cst {dimension_numbers = #tpu.dot_dimension_numbers<[1], [0], [0], [1], [0, 0, 1, 1], [], []>} : vector<16x32xf32>, vector<32x32xf32>, vector<16x32xf32> -> vector<16x32xf32>
    %c0_3 = arith.constant 0 : index
    %c0_4 = arith.constant 0 : index
    %3 = vector.load %arg5[%c0_3, %c0_4] : memref<1x32xf32, #tpu.memory_space<vmem>>, vector<1x32xf32>
    %4 = vector.broadcast %3 : vector<1x32xf32> to vector<16x32xf32>
    %5 = arith.addf %2, %4 : vector<16x32xf32>
    %c0_5 = arith.constant 0 : index
    %c0_6 = arith.constant 0 : index
    %6 = vector.load %arg3[%c0_5, %c0_6] : memref<32x32xf32, #tpu.memory_space<vmem>>, vector<32x32xf32>
    %cst_7 = arith.constant dense<0.000000e+00> : vector<16x32xf32>
    %7 = tpu.matmul %0, %6, %cst_7 {dimension_numbers = #tpu.dot_dimension_numbers<[1], [0], [0], [1], [0, 0, 1, 1], [], []>} : vector<16x32xf32>, vector<32x32xf32>, vector<16x32xf32> -> vector<16x32xf32>
    %c0_8 = arith.constant 0 : index
    %c0_9 = arith.constant 0 : index
    %8 = vector.load %arg6[%c0_8, %c0_9] : memref<1x32xf32, #tpu.memory_space<vmem>>, vector<1x32xf32>
    %9 = vector.broadcast %8 : vector<1x32xf32> to vector<16x32xf32>
    %10 = arith.addf %7, %9 : vector<16x32xf32>
    %c0_10 = arith.constant 0 : index
    %c0_11 = arith.constant 0 : index
    %11 = vector.load %arg4[%c0_10, %c0_11] : memref<32x32xf32, #tpu.memory_space<vmem>>, vector<32x32xf32>
    %cst_12 = arith.constant dense<0.000000e+00> : vector<16x32xf32>
    %12 = tpu.matmul %0, %11, %cst_12 {dimension_numbers = #tpu.dot_dimension_numbers<[1], [0], [0], [1], [0, 0, 1, 1], [], []>} : vector<16x32xf32>, vector<32x32xf32>, vector<16x32xf32> -> vector<16x32xf32>
    %c0_13 = arith.constant 0 : index
    %c0_14 = arith.constant 0 : index
    %13 = vector.load %arg7[%c0_13, %c0_14] : memref<1x32xf32, #tpu.memory_space<vmem>>, vector<1x32xf32>
    %14 = vector.broadcast %13 : vector<1x32xf32> to vector<16x32xf32>
    %15 = arith.addf %12, %14 : vector<16x32xf32>
    %16 = vector.extract_strided_slice %5 {offsets = [0, 0], sizes = [16, 16], strides = [1, 1]} : vector<16x32xf32> to vector<16x16xf32>
    %17 = vector.shape_cast %16 : vector<16x16xf32> to vector<1x16x16xf32>
    %18 = vector.extract_strided_slice %5 {offsets = [0, 16], sizes = [16, 16], strides = [1, 1]} : vector<16x32xf32> to vector<16x16xf32>
    %19 = vector.shape_cast %18 : vector<16x16xf32> to vector<1x16x16xf32>
    %20 = vector.shape_cast %17 : vector<1x16x16xf32> to vector<1x1x16x16xf32>
    %21 = vector.shape_cast %19 : vector<1x16x16xf32> to vector<1x1x16x16xf32>
    %22 = tpu.concatenate %20, %21 in 0 : vector<1x1x16x16xf32>, vector<1x1x16x16xf32> -> vector<2x1x16x16xf32>
    %23 = vector.shape_cast %22 : vector<2x1x16x16xf32> to vector<2x16x16xf32>
    %24 = vector.extract_strided_slice %10 {offsets = [0, 0], sizes = [16, 16], strides = [1, 1]} : vector<16x32xf32> to vector<16x16xf32>
    %25 = vector.shape_cast %24 : vector<16x16xf32> to vector<1x16x16xf32>
    %26 = vector.extract_strided_slice %10 {offsets = [0, 16], sizes = [16, 16], strides = [1, 1]} : vector<16x32xf32> to vector<16x16xf32>
    %27 = vector.shape_cast %26 : vector<16x16xf32> to vector<1x16x16xf32>
    %28 = vector.shape_cast %25 : vector<1x16x16xf32> to vector<1x1x16x16xf32>
    %29 = vector.shape_cast %27 : vector<1x16x16xf32> to vector<1x1x16x16xf32>
    %30 = tpu.concatenate %28, %29 in 0 : vector<1x1x16x16xf32>, vector<1x1x16x16xf32> -> vector<2x1x16x16xf32>
    %31 = vector.shape_cast %30 : vector<2x1x16x16xf32> to vector<2x16x16xf32>
    %32 = vector.extract_strided_slice %15 {offsets = [0, 0], sizes = [16, 16], strides = [1, 1]} : vector<16x32xf32> to vector<16x16xf32>
    %33 = vector.shape_cast %32 : vector<16x16xf32> to vector<1x16x16xf32>
    %34 = vector.extract_strided_slice %15 {offsets = [0, 16], sizes = [16, 16], strides = [1, 1]} : vector<16x32xf32> to vector<16x16xf32>
    %35 = vector.shape_cast %34 : vector<16x16xf32> to vector<1x16x16xf32>
    %36 = vector.shape_cast %33 : vector<1x16x16xf32> to vector<1x1x16x16xf32>
    %37 = vector.shape_cast %35 : vector<1x16x16xf32> to vector<1x1x16x16xf32>
    %38 = tpu.concatenate %36, %37 in 0 : vector<1x1x16x16xf32>, vector<1x1x16x16xf32> -> vector<2x1x16x16xf32>
    %39 = vector.shape_cast %38 : vector<2x1x16x16xf32> to vector<2x16x16xf32>
    "tpu.trace_start"() <{level = 10 : i32, message = "bsd,btd->bst"}> : () -> ()
    %cst_15 = arith.constant dense<0.000000e+00> : vector<2x16x16xf32>
    %40 = tpu.matmul %23, %31, %cst_15 {dimension_numbers = #tpu.dot_dimension_numbers<[2], [2], [1], [1], [0, 0, 0, 1, 1, 1], [0], [0]>} : vector<2x16x16xf32>, vector<2x16x16xf32>, vector<2x16x16xf32> -> vector<2x16x16xf32>
    "tpu.trace_stop"() : () -> ()
    %41 = vector.shape_cast %40 : vector<2x16x16xf32> to vector<2x1x16x16xf32>
    %c0_16 = arith.constant 0 : index
    %c0_17 = arith.constant 0 : index
    %c0_18 = arith.constant 0 : index
    %c0_19 = arith.constant 0 : index
    %42 = vector.load %arg8[%c0_16, %c0_17, %c0_18, %c0_19] : memref<2x1x16x16xf32, #tpu.memory_space<vmem>>, vector<2x1x16x16xf32>
    %43 = arith.addf %41, %42 : vector<2x1x16x16xf32>
    %44 = vector.shape_cast %43 : vector<2x1x16x16xf32> to vector<2x16x16xf32>
    %cst_20 = arith.constant dense<0xFF800000> : vector<2x16xf32>
    %45 = vector.multi_reduction <maximumf>, %44, %cst_20 [2] : vector<2x16x16xf32> to vector<2x16xf32>
    %46 = vector.shape_cast %45 : vector<2x16xf32> to vector<2x16x1xf32>
    %47 = vector.broadcast %46 : vector<2x16x1xf32> to vector<2x16x16xf32>
    %48 = arith.subf %44, %47 : vector<2x16x16xf32>
    %49 = math.exp %48 : vector<2x16x16xf32>
    %cst_21 = arith.constant dense<0.000000e+00> : vector<2x16xf32>
    %50 = vector.multi_reduction <add>, %49, %cst_21 [2] : vector<2x16x16xf32> to vector<2x16xf32>
    %51 = vector.shape_cast %50 : vector<2x16xf32> to vector<2x16x1xf32>
    "tpu.trace_start"() <{level = 10 : i32, message = "bst,btd->bsd"}> : () -> ()
    %cst_22 = arith.constant dense<0.000000e+00> : vector<2x16x16xf32>
    %52 = tpu.matmul %49, %39, %cst_22 {dimension_numbers = #tpu.dot_dimension_numbers<[2], [1], [1], [2], [0, 0, 0, 1, 1, 2], [0], [0]>} : vector<2x16x16xf32>, vector<2x16x16xf32>, vector<2x16x16xf32> -> vector<2x16x16xf32>
    "tpu.trace_stop"() : () -> ()
    %53 = tpu.reciprocal %51 : vector<2x16x1xf32> -> vector<2x16x1xf32>
    %54 = vector.broadcast %53 : vector<2x16x1xf32> to vector<2x16x16xf32>
    %55 = arith.mulf %52, %54 : vector<2x16x16xf32>
    %56 = vector.shape_cast %55 : vector<2x16x16xf32> to vector<2x1x16x16xf32>
    %57 = vector.extract_strided_slice %56 {offsets = [0, 0, 0, 0], sizes = [1, 1, 16, 16], strides = [1, 1, 1, 1]} : vector<2x1x16x16xf32> to vector<1x1x16x16xf32>
    %58 = vector.shape_cast %57 : vector<1x1x16x16xf32> to vector<1x16x16xf32>
    %59 = vector.shape_cast %58 : vector<1x16x16xf32> to vector<16x16xf32>
    %60 = vector.extract_strided_slice %56 {offsets = [1, 0, 0, 0], sizes = [1, 1, 16, 16], strides = [1, 1, 1, 1]} : vector<2x1x16x16xf32> to vector<1x1x16x16xf32>
    %61 = vector.shape_cast %60 : vector<1x1x16x16xf32> to vector<1x16x16xf32>
    %62 = vector.shape_cast %61 : vector<1x16x16xf32> to vector<16x16xf32>
    %63 = tpu.concatenate %59, %62 in 1 : vector<16x16xf32>, vector<16x16xf32> -> vector<16x32xf32>
    %c0_23 = arith.constant 0 : index
    %c0_24 = arith.constant 0 : index
    %64 = vector.load %arg9[%c0_23, %c0_24] : memref<16x32xf32, #tpu.memory_space<vmem>>, vector<16x32xf32>
    tpu.vector_store %arg9[%c0_23, %c0_24], %63 {strides = array<i32>} : memref<16x32xf32, #tpu.memory_space<vmem>>, vector<16x32xf32>,
    return
  }
  func.func @transform_0(%arg0: i32) -> (i32, i32) {
    %c0_i32 = arith.constant 0 : i32
    %c0_i32_0 = arith.constant 0 : i32
    return %arg0, %c0_i32 : i32, i32
  }
  func.func @transform_1(%arg0: i32) -> (i32, i32) {
    %c0_i32 = arith.constant 0 : i32
    %c0_i32_0 = arith.constant 0 : i32
    %c0_i32_1 = arith.constant 0 : i32
    return %c0_i32, %c0_i32_0 : i32, i32
  }
  func.func @transform_2(%arg0: i32) -> (i32, i32) {
    %c0_i32 = arith.constant 0 : i32
    %c0_i32_0 = arith.constant 0 : i32
    %c0_i32_1 = arith.constant 0 : i32
    return %c0_i32, %c0_i32_0 : i32, i32
  }
  func.func @transform_3(%arg0: i32) -> (i32, i32) {
    %c0_i32 = arith.constant 0 : i32
    %c0_i32_0 = arith.constant 0 : i32
    %c0_i32_1 = arith.constant 0 : i32
    return %c0_i32, %c0_i32_0 : i32, i32
  }
  func.func @transform_4(%arg0: i32) -> (i32, i32) {
    %c0_i32 = arith.constant 0 : i32
    %c0_i32_0 = arith.constant 0 : i32
    %c0_i32_1 = arith.constant 0 : i32
    return %c0_i32, %c0_i32_0 : i32, i32
  }
  func.func @transform_5(%arg0: i32) -> (i32, i32) {
    %c0_i32 = arith.constant 0 : i32
    %c0_i32_0 = arith.constant 0 : i32
    %c0_i32_1 = arith.constant 0 : i32
    return %c0_i32, %c0_i32_0 : i32, i32
  }
  func.func @transform_6(%arg0: i32) -> (i32, i32) {
    %c0_i32 = arith.constant 0 : i32
    %c0_i32_0 = arith.constant 0 : i32
    %c0_i32_1 = arith.constant 0 : i32
    return %c0_i32, %c0_i32_0 : i32, i32
  }
  func.func @transform_7(%arg0: i32) -> (i32, i32, i32, i32) {
    %c0_i32 = arith.constant 0 : i32
    %c0_i32_0 = arith.constant 0 : i32
    %c0_i32_1 = arith.constant 0 : i32
    %c0_i32_2 = arith.constant 0 : i32
    %c0_i32_3 = arith.constant 0 : i32
    return %c0_i32, %c0_i32_0, %c0_i32_1, %c0_i32_2 : i32, i32, i32, i32
  }
  func.func @transform_8(%arg0: i32) -> (i32, i32) {
    %c0_i32 = arith.constant 0 : i32
    %c0_i32_0 = arith.constant 0 : i32
    return %arg0, %c0_i32 : i32, i32
  }
}

module attributes {stable_mosaic.version = 11 : i64} {
  func.func @_swin_attention_kernel(%arg0: i32, %arg1: memref<16x32xf32, #tpu.memory_space<vmem>>, %arg2: memref<32x32xf32, #tpu.memory_space<vmem>>, %arg3: memref<32x32xf32, #tpu.memory_space<vmem>>, %arg4: memref<32x32xf32, #tpu.memory_space<vmem>>, %arg5: memref<1x32xf32, #tpu.memory_space<vmem>>, %arg6: memref<1x32xf32, #tpu.memory_space<vmem>>, %arg7: memref<1x32xf32, #tpu.memory_space<vmem>>, %arg8: memref<2x1x16x16xf32, #tpu.memory_space<vmem>>, %arg9: memref<16x32xf32, #tpu.memory_space<vmem>>) attributes {dimension_semantics = [#tpu.dimension_semantics<parallel>], iteration_bounds = array<i64: 2>, scalar_prefetch = 0 : i64, scratch_operands = 0 : i64, tpu.core_type = #tpu.core_type<tc>, window_params = [{transform_indices = @transform_0, window_bounds = array<i64: 16, 32>}, {pipeline_mode = #tpu.pipeline_mode<synchronous>, transform_indices = @transform_1, window_bounds = array<i64: 32, 32>}, {pipeline_mode = #tpu.pipeline_mode<synchronous>, transform_indices = @transform_2, window_bounds = array<i64: 32, 32>}, {pipeline_mode = #tpu.pipeline_mode<synchronous>, transform_indices = @transform_3, window_bounds = array<i64: 32, 32>}, {pipeline_mode = #tpu.pipeline_mode<synchronous>, transform_indices = @transform_4, window_bounds = array<i64: 1, 32>}, {pipeline_mode = #tpu.pipeline_mode<synchronous>, transform_indices = @transform_5, window_bounds = array<i64: 1, 32>}, {pipeline_mode = #tpu.pipeline_mode<synchronous>, transform_indices = @transform_6, window_bounds = array<i64: 1, 32>}, {pipeline_mode = #tpu.pipeline_mode<synchronous>, transform_indices = @transform_7, window_bounds = array<i64: 2, 1, 16, 16>}, {transform_indices = @transform_8, window_bounds = array<i64: 16, 32>}]} {
    %c0 = arith.constant 0 : index
    %c0_0 = arith.constant 0 : index
    %0 = vector.load %arg1[%c0, %c0_0] : memref<16x32xf32, #tpu.memory_space<vmem>>, vector<16x32xf32>
    %c0_1 = arith.constant 0 : index
    %c0_2 = arith.constant 0 : index
    %1 = vector.load %arg2[%c0_1, %c0_2] : memref<32x32xf32, #tpu.memory_space<vmem>>, vector<32x32xf32>
    %cst = arith.constant dense<0.000000e+00> : vector<16x32xf32>
    %2 = tpu.matmul %0, %1, %cst {dimension_numbers = #tpu.dot_dimension_numbers<[1], [0], [0], [1], [0, 0, 1, 1], [], []>} : vector<16x32xf32>, vector<32x32xf32>, vector<16x32xf32> -> vector<16x32xf32>
    %c0_3 = arith.constant 0 : index
    %c0_4 = arith.constant 0 : index
    %3 = vector.load %arg5[%c0_3, %c0_4] : memref<1x32xf32, #tpu.memory_space<vmem>>, vector<1x32xf32>
    %4 = vector.broadcast %3 : vector<1x32xf32> to vector<16x32xf32>
    %5 = arith.addf %2, %4 : vector<16x32xf32>
    %c0_5 = arith.constant 0 : index
    %c0_6 = arith.constant 0 : index
    %6 = vector.load %arg3[%c0_5, %c0_6] : memref<32x32xf32, #tpu.memory_space<vmem>>, vector<32x32xf32>
    %cst_7 = arith.constant dense<0.000000e+00> : vector<16x32xf32>
    %7 = tpu.matmul %0, %6, %cst_7 {dimension_numbers = #tpu.dot_dimension_numbers<[1], [0], [0], [1], [0, 0, 1, 1], [], []>} : vector<16x32xf32>, vector<32x32xf32>, vector<16x32xf32> -> vector<16x32xf32>
    %c0_8 = arith.constant 0 : index
    %c0_9 = arith.constant 0 : index
    %8 = vector.load %arg6[%c0_8, %c0_9] : memref<1x32xf32, #tpu.memory_space<vmem>>, vector<1x32xf32>
    %9 = vector.broadcast %8 : vector<1x32xf32> to vector<16x32xf32>
    %10 = arith.addf %7, %9 : vector<16x32xf32>
    %c0_10 = arith.constant 0 : index
    %c0_11 = arith.constant 0 : index
    %11 = vector.load %arg4[%c0_10, %c0_11] : memref<32x32xf32, #tpu.memory_space<vmem>>, vector<32x32xf32>
    %cst_12 = arith.constant dense<0.000000e+00> : vector<16x32xf32>
    %12 = tpu.matmul %0, %11, %cst_12 {dimension_numbers = #tpu.dot_dimension_numbers<[1], [0], [0], [1], [0, 0, 1, 1], [], []>} : vector<16x32xf32>, vector<32x32xf32>, vector<16x32xf32> -> vector<16x32xf32>
    %c0_13 = arith.constant 0 : index
    %c0_14 = arith.constant 0 : index
    %13 = vector.load %arg7[%c0_13, %c0_14] : memref<1x32xf32, #tpu.memory_space<vmem>>, vector<1x32xf32>
    %14 = vector.broadcast %13 : vector<1x32xf32> to vector<16x32xf32>
    %15 = arith.addf %12, %14 : vector<16x32xf32>
    %16 = vector.extract_strided_slice %5 {offsets = [0, 0], sizes = [16, 16], strides = [1, 1]} : vector<16x32xf32> to vector<16x16xf32>
    %17 = vector.shape_cast %16 : vector<16x16xf32> to vector<1x16x16xf32>
    %18 = vector.extract_strided_slice %5 {offsets = [0, 16], sizes = [16, 16], strides = [1, 1]} : vector<16x32xf32> to vector<16x16xf32>
    %19 = vector.shape_cast %18 : vector<16x16xf32> to vector<1x16x16xf32>
    %20 = vector.shape_cast %17 : vector<1x16x16xf32> to vector<1x1x16x16xf32>
    %21 = vector.shape_cast %19 : vector<1x16x16xf32> to vector<1x1x16x16xf32>
    %22 = tpu.concatenate %20, %21 in 0 : vector<1x1x16x16xf32>, vector<1x1x16x16xf32> -> vector<2x1x16x16xf32>
    %23 = vector.shape_cast %22 : vector<2x1x16x16xf32> to vector<2x16x16xf32>
    %24 = vector.extract_strided_slice %10 {offsets = [0, 0], sizes = [16, 16], strides = [1, 1]} : vector<16x32xf32> to vector<16x16xf32>
    %25 = vector.shape_cast %24 : vector<16x16xf32> to vector<1x16x16xf32>
    %26 = vector.extract_strided_slice %10 {offsets = [0, 16], sizes = [16, 16], strides = [1, 1]} : vector<16x32xf32> to vector<16x16xf32>
    %27 = vector.shape_cast %26 : vector<16x16xf32> to vector<1x16x16xf32>
    %28 = vector.shape_cast %25 : vector<1x16x16xf32> to vector<1x1x16x16xf32>
    %29 = vector.shape_cast %27 : vector<1x16x16xf32> to vector<1x1x16x16xf32>
    %30 = tpu.concatenate %28, %29 in 0 : vector<1x1x16x16xf32>, vector<1x1x16x16xf32> -> vector<2x1x16x16xf32>
    %31 = vector.shape_cast %30 : vector<2x1x16x16xf32> to vector<2x16x16xf32>
    %32 = vector.extract_strided_slice %15 {offsets = [0, 0], sizes = [16, 16], strides = [1, 1]} : vector<16x32xf32> to vector<16x16xf32>
    %33 = vector.shape_cast %32 : vector<16x16xf32> to vector<1x16x16xf32>
    %34 = vector.extract_strided_slice %15 {offsets = [0, 16], sizes = [16, 16], strides = [1, 1]} : vector<16x32xf32> to vector<16x16xf32>
    %35 = vector.shape_cast %34 : vector<16x16xf32> to vector<1x16x16xf32>
    %36 = vector.shape_cast %33 : vector<1x16x16xf32> to vector<1x1x16x16xf32>
    %37 = vector.shape_cast %35 : vector<1x16x16xf32> to vector<1x1x16x16xf32>
    %38 = tpu.concatenate %36, %37 in 0 : vector<1x1x16x16xf32>, vector<1x1x16x16xf32> -> vector<2x1x16x16xf32>
    %39 = vector.shape_cast %38 : vector<2x1x16x16xf32> to vector<2x16x16xf32>
    "tpu.trace_start"() <{level = 10 : i32, message = "bsd,btd->bst"}> : () -> ()
    %cst_15 = arith.constant dense<0.000000e+00> : vector<2x16x16xf32>
    %40 = tpu.matmul %23, %31, %cst_15 {dimension_numbers = #tpu.dot_dimension_numbers<[2], [2], [1], [1], [0, 0, 0, 1, 1, 1], [0], [0]>} : vector<2x16x16xf32>, vector<2x16x16xf32>, vector<2x16x16xf32> -> vector<2x16x16xf32>
    "tpu.trace_stop"() : () -> ()
    %41 = vector.shape_cast %40 : vector<2x16x16xf32> to vector<2x1x16x16xf32>
    %c0_16 = arith.constant 0 : index
    %c0_17 = arith.constant 0 : index
    %c0_18 = arith.constant 0 : index
    %c0_19 = arith.constant 0 : index
    %42 = vector.load %arg8[%c0_16, %c0_17, %c0_18, %c0_19] : memref<2x1x16x16xf32, #tpu.memory_space<vmem>>, vector<2x1x16x16xf32>
    %43 = arith.addf %41, %42 : vector<2x1x16x16xf32>
    %44 = vector.shape_cast %43 : vector<2x1x16x16xf32> to vector<2x16x16xf32>
    %cst_20 = arith.constant dense<0xFF800000> : vector<2x16xf32>
    %45 = vector.multi_reduction <maximumf>, %44, %cst_20 [2] : vector<2x16x16xf32> to vector<2x16xf32>
    %46 = vector.shape_cast %45 : vector<2x16xf32> to vector<2x16x1xf32>
    %47 = vector.broadcast %46 : vector<2x16x1xf32> to vector<2x16x16xf32>
    %48 = arith.subf %44, %47 : vector<2x16x16xf32>
    %49 = math.exp %48 : vector<2x16x16xf32>
    %cst_21 = arith.constant dense<0.000000e+00> : vector<2x16xf32>
    %50 = vector.multi_reduction <add>, %49, %cst_21 [2] : vector<2x16x16xf32> to vector<2x16xf32>
    %51 = vector.shape_cast %50 : vector<2x16xf32> to vector<2x16x1xf32>
    "tpu.trace_start"() <{level = 10 : i32, message = "bst,btd->bsd"}> : () -> ()
    %cst_22 = arith.constant dense<0.000000e+00> : vector<2x16x16xf32>
    %52 = tpu.matmul %49, %39, %cst_22 {dimension_numbers = #tpu.dot_dimension_numbers<[2], [1], [1], [2], [0, 0, 0, 1, 1, 2], [0], [0]>} : vector<2x16x16xf32>, vector<2x16x16xf32>, vector<2x16x16xf32> -> vector<2x16x16xf32>
    "tpu.trace_stop"() : () -> ()
    %53 = tpu.reciprocal %51 : vector<2x16x1xf32> -> vector<2x16x1xf32>
    %54 = vector.broadcast %53 : vector<2x16x1xf32> to vector<2x16x16xf32>
    %55 = arith.mulf %52, %54 : vector<2x16x16xf32>
    %56 = vector.shape_cast %55 : vector<2x16x16xf32> to vector<2x1x16x16xf32>
    %57 = vector.extract_strided_slice %56 {offsets = [0, 0, 0, 0], sizes = [1, 1, 16, 16], strides = [1, 1, 1, 1]} : vector<2x1x16x16xf32> to vector<1x1x16x16xf32>
    %58 = vector.shape_cast %57 : vector<1x1x16x16xf32> to vector<1x16x16xf32>
    %59 = vector.shape_cast %58 : vector<1x16x16xf32> to vector<16x16xf32>
    %60 = vector.extract_strided_slice %56 {offsets = [1, 0, 0, 0], sizes = [1, 1, 16, 16], strides = [1, 1, 1, 1]} : vector<2x1x16x16xf32> to vector<1x1x16x16xf32>
    %61 = vector.shape_cast %60 : vector<1x1x16x16xf32> to vector<1x16x16xf32>
    %62 = vector.shape_cast %61 : vector<1x16x16xf32> to vector<16x16xf32>
    %63 = tpu.concatenate %59, %62 in 1 : vector<16x16xf32>, vector<16x16xf32> -> vector<16x32xf32>
    %c0_23 = arith.constant 0 : index
    %c0_24 = arith.constant 0 : index
    %64 = vector.load %arg9[%c0_23, %c0_24] : memref<16x32xf32, #tpu.memory_space<vmem>>, vector<16x32xf32>
    tpu.vector_store %arg9[%c0_23, %c0_24], %63 {strides = array<i32>} : memref<16x32xf32, #tpu.memory_space<vmem>>, vector<16x32xf32>,
    return
  }
  func.func @transform_0(%arg0: i32) -> (i32, i32) {
    %c0_i32 = arith.constant 0 : i32
    %c0_i32_0 = arith.constant 0 : i32
    return %arg0, %c0_i32 : i32, i32
  }
  func.func @transform_1(%arg0: i32) -> (i32, i32) {
    %c0_i32 = arith.constant 0 : i32
    %c0_i32_0 = arith.constant 0 : i32
    %c0_i32_1 = arith.constant 0 : i32
    return %c0_i32, %c0_i32_0 : i32, i32
  }
  func.func @transform_2(%arg0: i32) -> (i32, i32) {
    %c0_i32 = arith.constant 0 : i32
    %c0_i32_0 = arith.constant 0 : i32
    %c0_i32_1 = arith.constant 0 : i32
    return %c0_i32, %c0_i32_0 : i32, i32
  }
  func.func @transform_3(%arg0: i32) -> (i32, i32) {
    %c0_i32 = arith.constant 0 : i32
    %c0_i32_0 = arith.constant 0 : i32
    %c0_i32_1 = arith.constant 0 : i32
    return %c0_i32, %c0_i32_0 : i32, i32
  }
  func.func @transform_4(%arg0: i32) -> (i32, i32) {
    %c0_i32 = arith.constant 0 : i32
    %c0_i32_0 = arith.constant 0 : i32
    %c0_i32_1 = arith.constant 0 : i32
    return %c0_i32, %c0_i32_0 : i32, i32
  }
  func.func @transform_5(%arg0: i32) -> (i32, i32) {
    %c0_i32 = arith.constant 0 : i32
    %c0_i32_0 = arith.constant 0 : i32
    %c0_i32_1 = arith.constant 0 : i32
    return %c0_i32, %c0_i32_0 : i32, i32
  }
  func.func @transform_6(%arg0: i32) -> (i32, i32) {
    %c0_i32 = arith.constant 0 : i32
    %c0_i32_0 = arith.constant 0 : i32
    %c0_i32_1 = arith.constant 0 : i32
    return %c0_i32, %c0_i32_0 : i32, i32
  }
  func.func @transform_7(%arg0: i32) -> (i32, i32, i32, i32) {
    %c0_i32 = arith.constant 0 : i32
    %c0_i32_0 = arith.constant 0 : i32
    %c0_i32_1 = arith.constant 0 : i32
    %c0_i32_2 = arith.constant 0 : i32
    %c0_i32_3 = arith.constant 0 : i32
    return %c0_i32, %c0_i32_0, %c0_i32_1, %c0_i32_2 : i32, i32, i32, i32
  }
  func.func @transform_8(%arg0: i32) -> (i32, i32) {
    %c0_i32 = arith.constant 0 : i32
    %c0_i32_0 = arith.constant 0 : i32
    return %arg0, %c0_i32 : i32, i32
  }
}

</mosaic_0001>

<llo_original>
// kernel: tpu_custom_call.1
$region0: #{tpu_custom_call.1}
  #allocation0 [shape = 'u32[]', space=smem, size = 0x4, offset = 0x4, fixed_abs, tag = 'smem constant byte address 0x4 - core index']
  #allocation1 [shape = 'u32[144,128]{1,0:T(1,128)}', space=vmem, size = 0x12000, scoped, tag = 'internal scratch']
  %s0 = inlined_call_operand.hbm [shape: f32[32,32], index: 0, kind: input, shape index: {}]
  %s1 = inlined_call_operand.hbm [shape: f32[32,32], index: 1, kind: input, shape index: {}]
  %s2 = inlined_call_operand.hbm [shape: f32[32,32], index: 2, kind: input, shape index: {}]
  %s3 = inlined_call_operand.hbm [shape: f32[32,32], index: 3, kind: input, shape index: {}]
  %s4 = inlined_call_operand.vmem [shape: f32[1,32], index: 4, kind: input, shape index: {}]
  %s5 = inlined_call_operand.vmem [shape: f32[1,32], index: 5, kind: input, shape index: {}]
  %s6 = inlined_call_operand.vmem [shape: f32[1,32], index: 6, kind: input, shape index: {}]
  %s7 = inlined_call_operand.hbm [shape: f32[2,1,16,16], index: 7, kind: input, shape index: {}]
  %s8 = inlined_call_operand.hbm [shape: f32[32,32], index: 8, kind: output, shape index: {}]
  %s9 = sld [smem:[#allocation0]]
  $region85: #{tpu_custom_call.1} parent=0
    _
  %s11 = ssub.s32 1, %s9
  %s12 = scalar_select 0, %s11, %s9
  $region1: #{tpu_custom_call.1} parent=0
    #allocation2 [shape = 'u8[16384]{0}', space=vmem, size = 0x4000, scoped, tag = 'input window, operand 0']
    #allocation3 [shape = 's32[2]{0}', space=sflag, size = 0x8, scoped, tag = 'scoped memory for tpu_custom_call.1']
    #allocation4 [shape = 's32[2]{0}', space=sflag, size = 0x8, scoped, tag = 'scoped memory for tpu_custom_call.1']
    #allocation5 [shape = 'u8[16384]{0}', space=vmem, size = 0x4000, scoped, tag = 'input window, operand 1, single buffered']
    #allocation6 [shape = 's32[1]{0}', space=sflag, size = 0x4, scoped, tag = 'scoped memory for tpu_custom_call.1']
    #allocation7 [shape = 'u8[16384]{0}', space=vmem, size = 0x4000, scoped, tag = 'input window, operand 2, single buffered']
    #allocation8 [shape = 'u8[16384]{0}', space=vmem, size = 0x4000, scoped, tag = 'input window, operand 3, single buffered']
    #allocation9 [shape = 's32[1]{0}', space=sflag, size = 0x4, scoped, tag = 'scoped memory for tpu_custom_call.1']
    #allocation10 [shape = 'u8[16384]{0}', space=vmem, size = 0x4000, scoped, tag = 'input window, operand 7, single buffered']
    #allocation11 [shape = 'u8[16384]{0}', space=vmem, size = 0x4000, scoped, tag = 'output window, operand 0']
    %13 = vsyncpa [#allocation3], 0
    %s14 = scalar_lea.sflag [#allocation3], 1
    %15 = vsyncpa %s14, 0
    %16 = vsyncpa [#allocation6], 0
    %17 = vsyncpa [#allocation9], 0
    %18 = vsyncpa [#allocation4], 0
    %s19 = scalar_lea.sflag [#allocation4], 1
    %20 = vsyncpa %s19, 0
    loop: start=0, step=1, limit=4
    $region2: #{tpu_custom_call.1} parent=1 // loop_pre_header
      _
    $region3: #{tpu_custom_call.1} parent=1 // loop_header
      %s22 = sphi 0, %s26
      %p23 = scmp.ge.s32.totalorder %s22, 4
      %s32 = sphi 0, %s34
      %s35 = sphi 0, %s32
      %s36 = sphi 0, %s35
      %s52 = sphi 0, %s36
      %s56 = sphi 0, %s56
      %s58 = sphi 0, %s56
      %s59 = sphi 0, %s58
      %s73 = sphi 0, %s59
      %s77 = sphi 0, %s77
      %s79 = sphi 0, %s77
      %s80 = sphi 0, %s79
      %s94 = sphi 0, %s80
      %s98 = sphi 0, %s98
      %s100 = sphi 0, %s98
      %s101 = sphi 0, %s100
      %s115 = sphi 0, %s101
      %s119 = sphi 0, %s119
      %s121 = sphi 0, %s119
      %s122 = sphi 0, %s121
      %s136 = sphi 0, %s122
      %s140 = sphi 0, %s140
      %s142 = sphi 0, %s140
      %s143 = sphi 0, %s142
      %s157 = sphi 0, %s143
      %s161 = sphi 0, %s161
      %s163 = sphi 0, %s161
      %s164 = sphi 0, %s163
      %s178 = sphi 0, %s164
      %s182 = sphi 0, %s182
      %s184 = sphi 0, %s182
      %s185 = sphi 0, %s184
      %s199 = sphi 0, %s185
      %s205 = sphi 0, %s207
      %s208 = sphi 0, %s205
      %s209 = sphi 0, %s208
      %s225 = sphi 0, %s209
    $region4: #{tpu_custom_call.1} parent=1 // loop_header_branch
      %25 = sbr.rel (%p23) target = $region8
    $region5: #{tpu_custom_call.1} parent=1 // loop_body
      %s27 = ssub.s32 %s22, 1
      %s28 = ssub.s32 %s22, 2
      %s29 = sadd.s32 %s22, 1
      %s30 = ssub.s32 %s22, %s29
      %p31 = scmp.eq.s32.totalorder %s30, 0
      %s33 = sadd.s32 %s32, 1
      %s34 = scalar_select %p31, %s32, %s33
      %p37 = pneg %p31
      %p38 = scmp.eq.s32.totalorder %s22, 1
      %p39 = por %p37, %p38
      %p40 = scmp.ne.s32.totalorder %s32, %s35
      %p41 = scmp.eq.s32.totalorder %s22, 0
      %p42 = por %p40, %p41
      %p43 = scmp.ne.s32.totalorder %s32, %s35
      %p44 = scmp.eq.s32.totalorder %s27, 1
      %p45 = por %p43, %p44
      %p46 = scmp.ne.s32.totalorder %s35, %s36
      %p47 = scmp.eq.s32.totalorder %s27, 0
      %p48 = por %p46, %p47
      %p49 = scmp.ne.s32.totalorder %s35, %s36
      %p50 = scmp.eq.s32.totalorder %s28, 1
      %p51 = por %p49, %p50
      %p53 = scmp.ne.s32.totalorder %s36, %s52
      %p54 = scmp.eq.s32.totalorder %s28, 0
      %p55 = por %p53, %p54
      %s57 = sadd.s32 %s56, 1
      %p60 = scmp.eq.s32.totalorder %s22, 1
      %p61 = scmp.ne.s32.totalorder %s56, %s58
      %p62 = scmp.eq.s32.totalorder %s22, 0
      %p63 = por %p61, %p62
      %p64 = scmp.ne.s32.totalorder %s56, %s58
      %p65 = scmp.eq.s32.totalorder %s27, 1
      %p66 = por %p64, %p65
      %p67 = scmp.ne.s32.totalorder %s58, %s59
      %p68 = scmp.eq.s32.totalorder %s27, 0
      %p69 = por %p67, %p68
      %p70 = scmp.ne.s32.totalorder %s58, %s59
      %p71 = scmp.eq.s32.totalorder %s28, 1
      %p72 = por %p70, %p71
      %p74 = scmp.ne.s32.totalorder %s59, %s73
      %p75 = scmp.eq.s32.totalorder %s28, 0
      %p76 = por %p74, %p75
      %s78 = sadd.s32 %s77, 1
      %p81 = scmp.eq.s32.totalorder %s22, 1
      %p82 = scmp.ne.s32.totalorder %s77, %s79
      %p83 = scmp.eq.s32.totalorder %s22, 0
      %p84 = por %p82, %p83
      %p85 = scmp.ne.s32.totalorder %s77, %s79
      %p86 = scmp.eq.s32.totalorder %s27, 1
      %p87 = por %p85, %p86
      %p88 = scmp.ne.s32.totalorder %s79, %s80
      %p89 = scmp.eq.s32.totalorder %s27, 0
      %p90 = por %p88, %p89
      %p91 = scmp.ne.s32.totalorder %s79, %s80
      %p92 = scmp.eq.s32.totalorder %s28, 1
      %p93 = por %p91, %p92
      %p95 = scmp.ne.s32.totalorder %s80, %s94
      %p96 = scmp.eq.s32.totalorder %s28, 0
      %p97 = por %p95, %p96
      %s99 = sadd.s32 %s98, 1
      %p102 = scmp.eq.s32.totalorder %s22, 1
      %p103 = scmp.ne.s32.totalorder %s98, %s100
      %p104 = scmp.eq.s32.totalorder %s22, 0
      %p105 = por %p103, %p104
      %p106 = scmp.ne.s32.totalorder %s98, %s100
      %p107 = scmp.eq.s32.totalorder %s27, 1
      %p108 = por %p106, %p107
      %p109 = scmp.ne.s32.totalorder %s100, %s101
      %p110 = scmp.eq.s32.totalorder %s27, 0
      %p111 = por %p109, %p110
      %p112 = scmp.ne.s32.totalorder %s100, %s101
      %p113 = scmp.eq.s32.totalorder %s28, 1
      %p114 = por %p112, %p113
      %p116 = scmp.ne.s32.totalorder %s101, %s115
      %p117 = scmp.eq.s32.totalorder %s28, 0
      %p118 = por %p116, %p117
      %s120 = sadd.s32 %s119, 1
      %p123 = scmp.eq.s32.totalorder %s22, 1
      %p124 = scmp.ne.s32.totalorder %s119, %s121
      %p125 = scmp.eq.s32.totalorder %s22, 0
      %p126 = por %p124, %p125
      %p127 = scmp.ne.s32.totalorder %s119, %s121
      %p128 = scmp.eq.s32.totalorder %s27, 1
      %p129 = por %p127, %p128
      %p130 = scmp.ne.s32.totalorder %s121, %s122
      %p131 = scmp.eq.s32.totalorder %s27, 0
      %p132 = por %p130, %p131
      %p133 = scmp.ne.s32.totalorder %s121, %s122
      %p134 = scmp.eq.s32.totalorder %s28, 1
      %p135 = por %p133, %p134
      %p137 = scmp.ne.s32.totalorder %s122, %s136
      %p138 = scmp.eq.s32.totalorder %s28, 0
      %p139 = por %p137, %p138
      %s141 = sadd.s32 %s140, 1
      %p144 = scmp.eq.s32.totalorder %s22, 1
      %p145 = scmp.ne.s32.totalorder %s140, %s142
      %p146 = scmp.eq.s32.totalorder %s22, 0
      %p147 = por %p145, %p146
      %p148 = scmp.ne.s32.totalorder %s140, %s142
      %p149 = scmp.eq.s32.totalorder %s27, 1
      %p150 = por %p148, %p149
      %p151 = scmp.ne.s32.totalorder %s142, %s143
      %p152 = scmp.eq.s32.totalorder %s27, 0
      %p153 = por %p151, %p152
      %p154 = scmp.ne.s32.totalorder %s142, %s143
      %p155 = scmp.eq.s32.totalorder %s28, 1
      %p156 = por %p154, %p155
      %p158 = scmp.ne.s32.totalorder %s143, %s157
      %p159 = scmp.eq.s32.totalorder %s28, 0
      %p160 = por %p158, %p159
      %s162 = sadd.s32 %s161, 1
      %p165 = scmp.eq.s32.totalorder %s22, 1
      %p166 = scmp.ne.s32.totalorder %s161, %s163
      %p167 = scmp.eq.s32.totalorder %s22, 0
      %p168 = por %p166, %p167
      %p169 = scmp.ne.s32.totalorder %s161, %s163
      %p170 = scmp.eq.s32.totalorder %s27, 1
      %p171 = por %p169, %p170
      %p172 = scmp.ne.s32.totalorder %s163, %s164
      %p173 = scmp.eq.s32.totalorder %s27, 0
      %p174 = por %p172, %p173
      %p175 = scmp.ne.s32.totalorder %s163, %s164
      %p176 = scmp.eq.s32.totalorder %s28, 1
      %p177 = por %p175, %p176
      %p179 = scmp.ne.s32.totalorder %s164, %s178
      %p180 = scmp.eq.s32.totalorder %s28, 0
      %p181 = por %p179, %p180
      %s183 = sadd.s32 %s182, 1
      %p186 = scmp.eq.s32.totalorder %s22, 1
      %p187 = scmp.ne.s32.totalorder %s182, %s184
      %p188 = scmp.eq.s32.totalorder %s22, 0
      %p189 = por %p187, %p188
      %p190 = scmp.ne.s32.totalorder %s182, %s184
      %p191 = scmp.eq.s32.totalorder %s27, 1
      %p192 = por %p190, %p191
      %p193 = scmp.ne.s32.totalorder %s184, %s185
      %p194 = scmp.eq.s32.totalorder %s27, 0
      %p195 = por %p193, %p194
      %p196 = scmp.ne.s32.totalorder %s184, %s185
      %p197 = scmp.eq.s32.totalorder %s28, 1
      %p198 = por %p196, %p197
      %p200 = scmp.ne.s32.totalorder %s185, %s199
      %p201 = scmp.eq.s32.totalorder %s28, 0
      %p202 = por %p200, %p201
      %s203 = ssub.s32 %s22, %s29
      %p204 = scmp.eq.s32.totalorder %s203, 0
      %s206 = sadd.s32 %s205, 1
      %s207 = scalar_select %p204, %s205, %s206
      %p210 = pneg %p204
      %p211 = scmp.eq.s32.totalorder %s22, 1
      %p212 = por %p210, %p211
      %p213 = scmp.ne.s32.totalorder %s205, %s208
      %p214 = scmp.eq.s32.totalorder %s22, 0
      %p215 = por %p213, %p214
      %p216 = scmp.ne.s32.totalorder %s205, %s208
      %p217 = scmp.eq.s32.totalorder %s27, 1
      %p218 = por %p216, %p217
      %p219 = scmp.ne.s32.totalorder %s208, %s209
      %p220 = scmp.eq.s32.totalorder %s27, 0
      %p221 = por %p219, %p220
      %p222 = scmp.ne.s32.totalorder %s208, %s209
      %p223 = scmp.eq.s32.totalorder %s28, 1
      %p224 = por %p222, %p223
      %p226 = scmp.ne.s32.totalorder %s209, %s225
      %p227 = scmp.eq.s32.totalorder %s28, 0
      %p228 = por %p226, %p227
      %p229 = scmp.le.s32.totalorder 1, %s22
      %p230 = scmp.lt.s32.totalorder %s22, 3
      %p231 = pnand %p229, %p230
      %p232 = pneg %p231
      // Predicated region
      $region9: #{tpu_custom_call.1} parent=5 // pred_check
        _
      $region10: #{tpu_custom_call.1} parent=5 // pred_check_branch
        %234 = sbr.rel (%p231) target = $region12
      $region11: #{tpu_custom_call.1} parent=5 // pred_region
        %s235 = ssub.s32 %s22, 1
        // Predicated region
        $region13: #{tpu_custom_call.1} parent=11 // pred_check
          %p236 = pneg %p69
        $region14: #{tpu_custom_call.1} parent=11 // pred_check_branch
          %238 = sbr.rel (%p236) target = $region16
        $region15: #{tpu_custom_call.1} parent=11 // pred_region
          %s240 = ssub.s32 512, 512
          %241 = vsyncadd [#allocation6], %s240
          %s242 = sshll.u32 [#allocation5], 4
          %s243 = int_to_ptr.vmem [resolvable:$true] %s242
          %248 = dma.hbm_to_vmem [thread:$0]  %s1, 512, %s243, [#allocation6], 128, 128, 8
        $region16: #{tpu_custom_call.1} parent=11 // pred_fallthru
          _
        // Predicated region
        $region17: #{tpu_custom_call.1} parent=11 // pred_check
          %p249 = pneg %p90
        $region18: #{tpu_custom_call.1} parent=11 // pred_check_branch
          %251 = sbr.rel (%p249) target = $region20
        $region19: #{tpu_custom_call.1} parent=11 // pred_region
          %s253 = ssub.s32 512, 512
          %254 = vsyncadd [#allocation6], %s253
          %s255 = sshll.u32 [#allocation7], 4
          %s256 = int_to_ptr.vmem [resolvable:$true] %s255
          %261 = dma.hbm_to_vmem [thread:$0]  %s2, 512, %s256, [#allocation6], 128, 128, 8
        $region20: #{tpu_custom_call.1} parent=11 // pred_fallthru
          _
        // Predicated region
        $region21: #{tpu_custom_call.1} parent=11 // pred_check
          %p262 = pneg %p111
        $region22: #{tpu_custom_call.1} parent=11 // pred_check_branch
          %264 = sbr.rel (%p262) target = $region24
        $region23: #{tpu_custom_call.1} parent=11 // pred_region
          %s266 = ssub.s32 512, 512
          %267 = vsyncadd [#allocation9], %s266
          %s268 = sshll.u32 [#allocation8], 4
          %s269 = int_to_ptr.vmem [resolvable:$true] %s268
          %274 = dma.hbm_to_vmem [thread:$0]  %s3, 512, %s269, [#allocation9], 128, 128, 8
        $region24: #{tpu_custom_call.1} parent=11 // pred_fallthru
          _
        // Predicated region
        $region25: #{tpu_custom_call.1} parent=11 // pred_check
          %p275 = pneg %p132
        $region26: #{tpu_custom_call.1} parent=11 // pred_check_branch
          %277 = sbr.rel (%p275) target = $region28
        $region27: #{tpu_custom_call.1} parent=11 // pred_region
          _
        $region28: #{tpu_custom_call.1} parent=11 // pred_fallthru
          _
        // Predicated region
        $region29: #{tpu_custom_call.1} parent=11 // pred_check
          %p278 = pneg %p153
        $region30: #{tpu_custom_call.1} parent=11 // pred_check_branch
          %280 = sbr.rel (%p278) target = $region32
        $region31: #{tpu_custom_call.1} parent=11 // pred_region
          _
        $region32: #{tpu_custom_call.1} parent=11 // pred_fallthru
          _
        // Predicated region
        $region33: #{tpu_custom_call.1} parent=11 // pred_check
          %p281 = pneg %p174
        $region34: #{tpu_custom_call.1} parent=11 // pred_check_branch
          %283 = sbr.rel (%p281) target = $region36
        $region35: #{tpu_custom_call.1} parent=11 // pred_region
          _
        $region36: #{tpu_custom_call.1} parent=11 // pred_fallthru
          _
        // Predicated region
        $region37: #{tpu_custom_call.1} parent=11 // pred_check
          %p284 = pneg %p195
        $region38: #{tpu_custom_call.1} parent=11 // pred_check_branch
          %286 = sbr.rel (%p284) target = $region40
        $region39: #{tpu_custom_call.1} parent=11 // pred_region
          %s288 = ssub.s32 512, 512
          %289 = vsyncadd [#allocation9], %s288
          %s290 = sshll.u32 [#allocation10], 4
          %s291 = int_to_ptr.vmem [resolvable:$true] %s290
          %296 = dma.hbm_to_vmem [thread:$0]  %s7, 512, %s291, [#allocation9], 128, 128, 8
        $region40: #{tpu_custom_call.1} parent=11 // pred_fallthru
          _
      $region12: #{tpu_custom_call.1} parent=5 // pred_fallthru
        _
      %p297 = scmp.lt.s32.totalorder %s22, 2
      // Predicated region
      $region41: #{tpu_custom_call.1} parent=5 // pred_check
        %p298 = pneg %p297
      $region42: #{tpu_custom_call.1} parent=5 // pred_check_branch
        %300 = sbr.rel (%p298) target = $region44
      $region43: #{tpu_custom_call.1} parent=5 // pred_region
        // Predicated region
        $region45: #{tpu_custom_call.1} parent=43 // pred_check
          %p301 = pneg %p42
        $region46: #{tpu_custom_call.1} parent=43 // pred_check_branch
          %303 = sbr.rel (%p301) target = $region48
        $region47: #{tpu_custom_call.1} parent=43 // pred_region
          %s304 = sand.u32 %s32, 1
          %s305 = scalar_lea.sflag [#allocation3], %s304
          %s306 = sand.u32 %s32, 1
          %s307 = smul.addr %s306, 16
          %s308 = scalar_lea.vmem [#allocation2], %s307
          %s309 = smul.u32 2, %s22
          %s311 = ssub.s32 256, 256
          %312 = vsyncadd %s305, %s311
          %s313 = smul.addr %s309, 128
          %s314 = scalar_lea.hbm %s0, %s313
          %s315 = sshll.u32 %s308, 4
          %s316 = int_to_ptr.vmem [resolvable:$true] %s315
          %321 = dma.hbm_to_vmem [thread:$0]  %s314, 256, %s316, %s305, 128, 128, 8
        $region48: #{tpu_custom_call.1} parent=43 // pred_fallthru
          _
      $region44: #{tpu_custom_call.1} parent=5 // pred_fallthru
        _
      %p322 = scmp.le.s32.totalorder 1, %s22
      %p323 = scmp.lt.s32.totalorder %s22, 3
      %p324 = pnand %p322, %p323
      %p325 = pneg %p324
      // Predicated region
      $region49: #{tpu_custom_call.1} parent=5 // pred_check
        _
      $region50: #{tpu_custom_call.1} parent=5 // pred_check_branch
        %327 = sbr.rel (%p324) target = $region52
      $region51: #{tpu_custom_call.1} parent=5 // pred_region
        %s328 = ssub.s32 %s22, 1
        %s329 = sand.u32 %s35, 1
        %s330 = scalar_lea.sflag [#allocation3], %s329
        %s331 = sand.u32 %s35, 1
        %s332 = smul.addr %s331, 16
        %s333 = scalar_lea.vmem [#allocation2], %s332
        // Predicated region
        $region53: #{tpu_custom_call.1} parent=51 // pred_check
          %p334 = pneg %p48
        $region54: #{tpu_custom_call.1} parent=51 // pred_check_branch
          %336 = sbr.rel (%p334) target = $region56
        $region55: #{tpu_custom_call.1} parent=51 // pred_region
          %337 = dma.done %s330, 256
        $region56: #{tpu_custom_call.1} parent=51 // pred_fallthru
          _
        // Predicated region
        $region57: #{tpu_custom_call.1} parent=51 // pred_check
          %p338 = pneg %p69
        $region58: #{tpu_custom_call.1} parent=51 // pred_check_branch
          %340 = sbr.rel (%p338) target = $region60
        $region59: #{tpu_custom_call.1} parent=51 // pred_region
          %341 = dma.done [#allocation6], 512
        $region60: #{tpu_custom_call.1} parent=51 // pred_fallthru
          _
        // Predicated region
        $region61: #{tpu_custom_call.1} parent=51 // pred_check
          %p342 = pneg %p90
        $region62: #{tpu_custom_call.1} parent=51 // pred_check_branch
          %344 = sbr.rel (%p342) target = $region64
        $region63: #{tpu_custom_call.1} parent=51 // pred_region
          %345 = dma.done [#allocation6], 512
        $region64: #{tpu_custom_call.1} parent=51 // pred_fallthru
          _
        // Predicated region
        $region65: #{tpu_custom_call.1} parent=51 // pred_check
          %p346 = pneg %p111
        $region66: #{tpu_custom_call.1} parent=51 // pred_check_branch
          %348 = sbr.rel (%p346) target = $region68
        $region67: #{tpu_custom_call.1} parent=51 // pred_region
          %349 = dma.done [#allocation9], 512
        $region68: #{tpu_custom_call.1} parent=51 // pred_fallthru
          _
        // Predicated region
        $region69: #{tpu_custom_call.1} parent=51 // pred_check
          %p350 = pneg %p195
        $region70: #{tpu_custom_call.1} parent=51 // pred_check_branch
          %352 = sbr.rel (%p350) target = $region72
        $region71: #{tpu_custom_call.1} parent=51 // pred_region
          %353 = dma.done [#allocation9], 512
        $region72: #{tpu_custom_call.1} parent=51 // pred_fallthru
          _
        %s354 = sand.u32 %s35, 1
        %s355 = scalar_lea.sflag [#allocation3], %s354
        %s356 = sand.u32 %s35, 1
        %s357 = smul.addr %s356, 16
        %s358 = scalar_lea.vmem [#allocation2], %s357
        %p359 = pneg %p48
        %p360 = pneg %p45
        %p361 = pneg %p69
        %p362 = pneg %p66
        %p363 = pneg %p90
        %p364 = pneg %p87
        %p365 = pneg %p111
        %p366 = pneg %p108
        %p367 = pneg %p132
        %p368 = pneg %p129
        %p369 = pneg %p153
        %p370 = pneg %p150
        %p371 = pneg %p174
        %p372 = pneg %p171
        %p373 = pneg %p195
        %p374 = pneg %p192
        %p375 = pneg %p221
        %p376 = pneg %p218
        %s377 = sand.u32 %s208, 1
        %s378 = scalar_lea.sflag [#allocation4], %s377
        %s379 = sand.u32 %s208, 1
        %s380 = smul.addr %s379, 16
        %s381 = scalar_lea.vmem [#allocation11], %s380
        %s382 = smul.u32 2, %s27
        %s383 = smul.u32 2, %s27
        %v384 = vld [vmem:[%s333] sm:$0xff]
        %v385 = vld [vmem:[%s333 + $0x8] sm:$0xff]
        %v386 = vld [vmem:[#allocation5] sm:$0xff]
        %v387 = vld [vmem:[#allocation5 + $0x8] sm:$0xff]
        %v388 = vld [vmem:[#allocation5 + $0x10] sm:$0xff]
        %v389 = vld [vmem:[#allocation5 + $0x18] sm:$0xff]
        %v390 = vld [vmem:[%s4] sm:$0x1]
        %v392 = vlaneseq
        %v393 = vshrl.u32 %v392, 7
        %v394 = vsub.s32 0, %v393
        %v395 = vrot.slane %v390, %v394
        %vm397 = vcmask 261120
        %v399 = vsel %vm397, %v384, 0
        %v402 = vsel %vm397, %v385, 0
        %404 = vmatprep.subr.mxu0 0.0
        %405 = vmatpush1.msra.mxu0 %v386
        %406 = vmatprep.subr.mxu0 0.0
        %407 = vmatpush1.msra.mxu0 %v387
        %408 = vmatprep.subr.mxu0 0.0
        %409 = vmatpush1.msra.mxu0 %v388
        %410 = vmatprep.subr.mxu0 0.0
        %411 = vmatpush1.msra.mxu0 %v389
        %412 = vmatprep.subr.mxu0 0.0
        %413 = vmatpush1.msra.mxu0 0.0
        %414 = vmatprep.subr.mxu0 0.0
        %415 = vmatpush1.msra.mxu0 0.0
        %416 = vmatprep.subr.mxu0 0.0
        %417 = vmatpush1.msra.mxu0 0.0
        %418 = vmatprep.subr.mxu0 0.0
        %419 = vmatpush1.msra.mxu0 0.0
        %420 = vmatprep.subr.mxu0 0.0
        %421 = vmatpush1.msra.mxu0 0.0
        %422 = vmatprep.subr.mxu0 0.0
        %423 = vmatpush1.msra.mxu0 0.0
        %424 = vmatprep.subr.mxu0 0.0
        %425 = vmatpush1.msra.mxu0 0.0
        %426 = vmatprep.subr.mxu0 0.0
        %427 = vmatpush1.msra.mxu0 0.0
        %428 = vmatprep.subr.mxu0 0.0
        %429 = vmatpush1.msra.mxu0 0.0
        %430 = vmatprep.subr.mxu0 0.0
        %431 = vmatpush1.msra.mxu0 0.0
        %432 = vmatprep.subr.mxu0 0.0
        %433 = vmatpush1.msra.mxu0 0.0
        %434 = vmatprep.subr.mxu0 0.0
        %435 = vmatpush1.msra.mxu0 0.0
        %436 = vmatprep.subr.mxu0 0.0
        %437 = vmatpush1.msra.mxu0 0.0
        %438 = vmatprep.subr.mxu0 0.0
        %439 = vmatpush1.msra.mxu0 0.0
        %440 = vmatprep.subr.mxu0 0.0
        %441 = vmatpush1.msra.mxu0 0.0
        %442 = vmatprep.subr.mxu0 0.0
        %443 = vmatpush1.msra.mxu0 0.0
        %444 = vmatprep.subr.mxu0 0.0
        %445 = vmatpush1.msra.mxu0 0.0
        %446 = vmatprep.subr.mxu0 0.0
        %447 = vmatpush1.msra.mxu0 0.0
        %448 = vmatprep.subr.mxu0 0.0
        %449 = vmatpush1.msra.mxu0 0.0
        %450 = vmatprep.subr.mxu0 0.0
        %451 = vmatpush1.msra.mxu0 0.0
        %452 = vmatprep.subr.mxu0 0.0
        %453 = vmatpush1.msra.mxu0 0.0
        %454 = vmatprep.subr.mxu0 0.0
        %455 = vmatpush1.msra.mxu0 0.0
        %456 = vmatprep.subr.mxu0 0.0
        %457 = vmatpush1.msra.mxu0 0.0
        %458 = vmatprep.subr.mxu0 0.0
        %459 = vmatpush1.msra.mxu0 0.0
        %460 = vmatprep.subr.mxu0 0.0
        %461 = vmatpush1.msra.mxu0 0.0
        %462 = vmatprep.subr.mxu0 0.0
        %463 = vmatpush1.msra.mxu0 0.0
        %464 = vmatprep.subr.mxu0 0.0
        %465 = vmatpush1.msra.mxu0 0.0
        %466 = vmatprep.subr.mxu0 0.0
        %467 = vmatpush1.msra.mxu0 0.0
        %468 = vmatprep.mubr.f32.mxu0 0.0
        %469 = vmatmul.mubr.f32.gmra.mrb[0].mxu0 %v399
        %v470 = vpop.f32.mrb[0].mxu0
        %v471 = vadd.f32 %v395, %v470
        %v472 = vpop.f32.mrb[0].mxu0
        %473 = vmatprep.mubr.f32.mxu0 0.0
        %474 = vmatmul.mubr.f32.gmra.mrb[0].mxu0 %v402
        %v475 = vpop.f32.mrb[0].mxu0
        %v476 = vadd.f32 %v395, %v475
        %v477 = vpop.f32.mrb[0].mxu0
        %478 = vdwg.mxu0
        %v479 = vld [vmem:[#allocation7] sm:$0xff]
        %v480 = vld [vmem:[#allocation7 + $0x8] sm:$0xff]
        %v481 = vld [vmem:[#allocation7 + $0x10] sm:$0xff]
        %v482 = vld [vmem:[#allocation7 + $0x18] sm:$0xff]
        %v483 = vld [vmem:[%s5] sm:$0x1]
        %v485 = vlaneseq
        %v486 = vshrl.u32 %v485, 7
        %v487 = vsub.s32 0, %v486
        %v488 = vrot.slane %v483, %v487
        %490 = vmatprep.subr.mxu0 0.0
        %491 = vmatpush1.msra.mxu0 %v479
        %492 = vmatprep.subr.mxu0 0.0
        %493 = vmatpush1.msra.mxu0 %v480
        %494 = vmatprep.subr.mxu0 0.0
        %495 = vmatpush1.msra.mxu0 %v481
        %496 = vmatprep.subr.mxu0 0.0
        %497 = vmatpush1.msra.mxu0 %v482
        %498 = vmatprep.subr.mxu0 0.0
        %499 = vmatpush1.msra.mxu0 0.0
        %500 = vmatprep.subr.mxu0 0.0
        %501 = vmatpush1.msra.mxu0 0.0
        %502 = vmatprep.subr.mxu0 0.0
        %503 = vmatpush1.msra.mxu0 0.0
        %504 = vmatprep.subr.mxu0 0.0
        %505 = vmatpush1.msra.mxu0 0.0
        %506 = vmatprep.subr.mxu0 0.0
        %507 = vmatpush1.msra.mxu0 0.0
        %508 = vmatprep.subr.mxu0 0.0
        %509 = vmatpush1.msra.mxu0 0.0
        %510 = vmatprep.subr.mxu0 0.0
        %511 = vmatpush1.msra.mxu0 0.0
        %512 = vmatprep.subr.mxu0 0.0
        %513 = vmatpush1.msra.mxu0 0.0
        %514 = vmatprep.subr.mxu0 0.0
        %515 = vmatpush1.msra.mxu0 0.0
        %516 = vmatprep.subr.mxu0 0.0
        %517 = vmatpush1.msra.mxu0 0.0
        %518 = vmatprep.subr.mxu0 0.0
        %519 = vmatpush1.msra.mxu0 0.0
        %520 = vmatprep.subr.mxu0 0.0
        %521 = vmatpush1.msra.mxu0 0.0
        %522 = vmatprep.subr.mxu0 0.0
        %523 = vmatpush1.msra.mxu0 0.0
        %524 = vmatprep.subr.mxu0 0.0
        %525 = vmatpush1.msra.mxu0 0.0
        %526 = vmatprep.subr.mxu0 0.0
        %527 = vmatpush1.msra.mxu0 0.0
        %528 = vmatprep.subr.mxu0 0.0
        %529 = vmatpush1.msra.mxu0 0.0
        %530 = vmatprep.subr.mxu0 0.0
        %531 = vmatpush1.msra.mxu0 0.0
        %532 = vmatprep.subr.mxu0 0.0
        %533 = vmatpush1.msra.mxu0 0.0
        %534 = vmatprep.subr.mxu0 0.0
        %535 = vmatpush1.msra.mxu0 0.0
        %536 = vmatprep.subr.mxu0 0.0
        %537 = vmatpush1.msra.mxu0 0.0
        %538 = vmatprep.subr.mxu0 0.0
        %539 = vmatpush1.msra.mxu0 0.0
        %540 = vmatprep.subr.mxu0 0.0
        %541 = vmatpush1.msra.mxu0 0.0
        %542 = vmatprep.subr.mxu0 0.0
        %543 = vmatpush1.msra.mxu0 0.0
        %544 = vmatprep.subr.mxu0 0.0
        %545 = vmatpush1.msra.mxu0 0.0
        %546 = vmatprep.subr.mxu0 0.0
        %547 = vmatpush1.msra.mxu0 0.0
        %548 = vmatprep.subr.mxu0 0.0
        %549 = vmatpush1.msra.mxu0 0.0
        %550 = vmatprep.subr.mxu0 0.0
        %551 = vmatpush1.msra.mxu0 0.0
        %552 = vmatprep.subr.mxu0 0.0
        %553 = vmatpush1.msra.mxu0 0.0
        %554 = vmatprep.mubr.f32.mxu0 0.0
        %555 = vmatmul.mubr.f32.gmra.mrb[0].mxu0 %v399
        %v556 = vpop.f32.mrb[0].mxu0
        %v557 = vadd.f32 %v488, %v556
        %v558 = vpop.f32.mrb[0].mxu0
        %559 = vmatprep.mubr.f32.mxu0 0.0
        %560 = vmatmul.mubr.f32.gmra.mrb[0].mxu0 %v402
        %v561 = vpop.f32.mrb[0].mxu0
        %v562 = vadd.f32 %v488, %v561
        %v563 = vpop.f32.mrb[0].mxu0
        %564 = vdwg.mxu0
        %v565 = vld [vmem:[#allocation8] sm:$0xff]
        %v566 = vld [vmem:[#allocation8 + $0x8] sm:$0xff]
        %v567 = vld [vmem:[#allocation8 + $0x10] sm:$0xff]
        %v568 = vld [vmem:[#allocation8 + $0x18] sm:$0xff]
        %v569 = vld [vmem:[%s6] sm:$0x1]
        %v571 = vlaneseq
        %v572 = vshrl.u32 %v571, 7
        %v573 = vsub.s32 0, %v572
        %v574 = vrot.slane %v569, %v573
        %576 = vmatprep.subr.mxu0 0.0
        %577 = vmatpush1.msra.mxu0 %v565
        %578 = vmatprep.subr.mxu0 0.0
        %579 = vmatpush1.msra.mxu0 %v566
        %580 = vmatprep.subr.mxu0 0.0
        %581 = vmatpush1.msra.mxu0 %v567
        %582 = vmatprep.subr.mxu0 0.0
        %583 = vmatpush1.msra.mxu0 %v568
        %584 = vmatprep.subr.mxu0 0.0
        %585 = vmatpush1.msra.mxu0 0.0
        %586 = vmatprep.subr.mxu0 0.0
        %587 = vmatpush1.msra.mxu0 0.0
        %588 = vmatprep.subr.mxu0 0.0
        %589 = vmatpush1.msra.mxu0 0.0
        %590 = vmatprep.subr.mxu0 0.0
        %591 = vmatpush1.msra.mxu0 0.0
        %592 = vmatprep.subr.mxu0 0.0
        %593 = vmatpush1.msra.mxu0 0.0
        %594 = vmatprep.subr.mxu0 0.0
        %595 = vmatpush1.msra.mxu0 0.0
        %596 = vmatprep.subr.mxu0 0.0
        %597 = vmatpush1.msra.mxu0 0.0
        %598 = vmatprep.subr.mxu0 0.0
        %599 = vmatpush1.msra.mxu0 0.0
        %600 = vmatprep.subr.mxu0 0.0
        %601 = vmatpush1.msra.mxu0 0.0
        %602 = vmatprep.subr.mxu0 0.0
        %603 = vmatpush1.msra.mxu0 0.0
        %604 = vmatprep.subr.mxu0 0.0
        %605 = vmatpush1.msra.mxu0 0.0
        %606 = vmatprep.subr.mxu0 0.0
        %607 = vmatpush1.msra.mxu0 0.0
        %608 = vmatprep.subr.mxu0 0.0
        %609 = vmatpush1.msra.mxu0 0.0
        %610 = vmatprep.subr.mxu0 0.0
        %611 = vmatpush1.msra.mxu0 0.0
        %612 = vmatprep.subr.mxu0 0.0
        %613 = vmatpush1.msra.mxu0 0.0
        %614 = vmatprep.subr.mxu0 0.0
        %615 = vmatpush1.msra.mxu0 0.0
        %616 = vmatprep.subr.mxu0 0.0
        %617 = vmatpush1.msra.mxu0 0.0
        %618 = vmatprep.subr.mxu0 0.0
        %619 = vmatpush1.msra.mxu0 0.0
        %620 = vmatprep.subr.mxu0 0.0
        %621 = vmatpush1.msra.mxu0 0.0
        %622 = vmatprep.subr.mxu0 0.0
        %623 = vmatpush1.msra.mxu0 0.0
        %624 = vmatprep.subr.mxu0 0.0
        %625 = vmatpush1.msra.mxu0 0.0
        %626 = vmatprep.subr.mxu0 0.0
        %627 = vmatpush1.msra.mxu0 0.0
        %628 = vmatprep.subr.mxu0 0.0
        %629 = vmatpush1.msra.mxu0 0.0
        %630 = vmatprep.subr.mxu0 0.0
        %631 = vmatpush1.msra.mxu0 0.0
        %632 = vmatprep.subr.mxu0 0.0
        %633 = vmatpush1.msra.mxu0 0.0
        %634 = vmatprep.subr.mxu0 0.0
        %635 = vmatpush1.msra.mxu0 0.0
        %636 = vmatprep.subr.mxu0 0.0
        %637 = vmatpush1.msra.mxu0 0.0
        %638 = vmatprep.subr.mxu0 0.0
        %639 = vmatpush1.msra.mxu0 0.0
        %640 = vmatprep.mubr.f32.mxu0 0.0
        %641 = vmatmul.mubr.f32.gmra.mrb[0].mxu0 %v399
        %v642 = vpop.f32.mrb[0].mxu0
        %v643 = vadd.f32 %v574, %v642
        %v644 = vpop.f32.mrb[0].mxu0
        %645 = vmatprep.mubr.f32.mxu0 0.0
        %646 = vmatmul.mubr.f32.gmra.mrb[0].mxu0 %v402
        %v647 = vpop.f32.mrb[0].mxu0
        %v648 = vadd.f32 %v574, %v647
        %v649 = vpop.f32.mrb[0].mxu0
        %650 = vdwg.mxu0
        %653 = vrot.lane.b32.xlu0 %v471, 112
        %v654 = vpop.permute.xlu0 %653
        %655 = vrot.lane.b32.xlu0 %v476, 112
        %v656 = vpop.permute.xlu0 %655
        %659 = vrot.lane.b32.xlu0 %v557, 112
        %v660 = vpop.permute.xlu0 %659
        %661 = vrot.lane.b32.xlu0 %v562, 112
        %v662 = vpop.permute.xlu0 %661
        %665 = vrot.lane.b32.xlu0 %v643, 112
        %v666 = vpop.permute.xlu0 %665
        %667 = vrot.lane.b32.xlu0 %v648, 112
        %v668 = vpop.permute.xlu0 %667
        %vm671 = vcmask 130048
        %v672 = vsel %vm671, %v471, 0
        %v674 = vsel %vm671, %v476, 0
        %v676 = vsel %vm671, %v557, 0
        %v678 = vsel %vm671, %v562, 0
        %680 = vmatprep.subr.mxu0 0.0
        %681 = vmatpush1.xpose.msra.mxu0 %v676
        %682 = vmatprep.subr.mxu0 0.0
        %683 = vmatpush1.xpose.msra.mxu0 %v678
        %684 = vmatprep.subr.mxu0 0.0
        %685 = vmatpush1.xpose.msra.mxu0 0.0
        %686 = vmatprep.subr.mxu0 0.0
        %687 = vmatpush1.xpose.msra.mxu0 0.0
        %688 = vmatprep.subr.mxu0 0.0
        %689 = vmatpush1.xpose.msra.mxu0 0.0
        %690 = vmatprep.subr.mxu0 0.0
        %691 = vmatpush1.xpose.msra.mxu0 0.0
        %692 = vmatprep.subr.mxu0 0.0
        %693 = vmatpush1.xpose.msra.mxu0 0.0
        %694 = vmatprep.subr.mxu0 0.0
        %695 = vmatpush1.xpose.msra.mxu0 0.0
        %696 = vmatprep.subr.mxu0 0.0
        %697 = vmatpush1.xpose.msra.mxu0 0.0
        %698 = vmatprep.subr.mxu0 0.0
        %699 = vmatpush1.xpose.msra.mxu0 0.0
        %700 = vmatprep.subr.mxu0 0.0
        %701 = vmatpush1.xpose.msra.mxu0 0.0
        %702 = vmatprep.subr.mxu0 0.0
        %703 = vmatpush1.xpose.msra.mxu0 0.0
        %704 = vmatprep.subr.mxu0 0.0
        %705 = vmatpush1.xpose.msra.mxu0 0.0
        %706 = vmatprep.subr.mxu0 0.0
        %707 = vmatpush1.xpose.msra.mxu0 0.0
        %708 = vmatprep.subr.mxu0 0.0
        %709 = vmatpush1.xpose.msra.mxu0 0.0
        %710 = vmatprep.subr.mxu0 0.0
        %711 = vmatpush1.xpose.msra.mxu0 0.0
        %712 = vmatprep.subr.mxu0 0.0
        %713 = vmatpush1.xpose.msra.mxu0 0.0
        %714 = vmatprep.subr.mxu0 0.0
        %715 = vmatpush1.xpose.msra.mxu0 0.0
        %716 = vmatprep.subr.mxu0 0.0
        %717 = vmatpush1.xpose.msra.mxu0 0.0
        %718 = vmatprep.subr.mxu0 0.0
        %719 = vmatpush1.xpose.msra.mxu0 0.0
        %720 = vmatprep.subr.mxu0 0.0
        %721 = vmatpush1.xpose.msra.mxu0 0.0
        %722 = vmatprep.subr.mxu0 0.0
        %723 = vmatpush1.xpose.msra.mxu0 0.0
        %724 = vmatprep.subr.mxu0 0.0
        %725 = vmatpush1.xpose.msra.mxu0 0.0
        %726 = vmatprep.subr.mxu0 0.0
        %727 = vmatpush1.xpose.msra.mxu0 0.0
        %728 = vmatprep.subr.mxu0 0.0
        %729 = vmatpush1.xpose.msra.mxu0 0.0
        %730 = vmatprep.subr.mxu0 0.0
        %731 = vmatpush1.xpose.msra.mxu0 0.0
        %732 = vmatprep.subr.mxu0 0.0
        %733 = vmatpush1.xpose.msra.mxu0 0.0
        %734 = vmatprep.subr.mxu0 0.0
        %735 = vmatpush1.xpose.msra.mxu0 0.0
        %736 = vmatprep.subr.mxu0 0.0
        %737 = vmatpush1.xpose.msra.mxu0 0.0
        %738 = vmatprep.subr.mxu0 0.0
        %739 = vmatpush1.xpose.msra.mxu0 0.0
        %740 = vmatprep.subr.mxu0 0.0
        %741 = vmatpush1.xpose.msra.mxu0 0.0
        %742 = vmatprep.subr.mxu0 0.0
        %743 = vmatpush1.xpose.msra.mxu0 0.0
        %744 = vmatprep.mubr.f32.mxu0 0.0
        %745 = vmatmul.mubr.f32.gmra.mrb[0].mxu0 %v672
        %v746 = vpop.f32.mrb[0].mxu0
        %v747 = vadd.f32 0.0, %v746
        %v748 = vpop.f32.mrb[0].mxu0
        %749 = vmatprep.mubr.f32.mxu0 0.0
        %750 = vmatmul.mubr.f32.gmra.mrb[0].mxu0 %v674
        %v751 = vpop.f32.mrb[0].mxu0
        %v752 = vadd.f32 0.0, %v751
        %v753 = vpop.f32.mrb[0].mxu0
        %754 = vdwg.mxu0
        %v755 = vsel %vm671, %v654, 0
        %v757 = vsel %vm671, %v656, 0
        %v759 = vsel %vm671, %v660, 0
        %v761 = vsel %vm671, %v662, 0
        %763 = vmatprep.subr.mxu0 0.0
        %764 = vmatpush1.xpose.msra.mxu0 %v759
        %765 = vmatprep.subr.mxu0 0.0
        %766 = vmatpush1.xpose.msra.mxu0 %v761
        %767 = vmatprep.subr.mxu0 0.0
        %768 = vmatpush1.xpose.msra.mxu0 0.0
        %769 = vmatprep.subr.mxu0 0.0
        %770 = vmatpush1.xpose.msra.mxu0 0.0
        %771 = vmatprep.subr.mxu0 0.0
        %772 = vmatpush1.xpose.msra.mxu0 0.0
        %773 = vmatprep.subr.mxu0 0.0
        %774 = vmatpush1.xpose.msra.mxu0 0.0
        %775 = vmatprep.subr.mxu0 0.0
        %776 = vmatpush1.xpose.msra.mxu0 0.0
        %777 = vmatprep.subr.mxu0 0.0
        %778 = vmatpush1.xpose.msra.mxu0 0.0
        %779 = vmatprep.subr.mxu0 0.0
        %780 = vmatpush1.xpose.msra.mxu0 0.0
        %781 = vmatprep.subr.mxu0 0.0
        %782 = vmatpush1.xpose.msra.mxu0 0.0
        %783 = vmatprep.subr.mxu0 0.0
        %784 = vmatpush1.xpose.msra.mxu0 0.0
        %785 = vmatprep.subr.mxu0 0.0
        %786 = vmatpush1.xpose.msra.mxu0 0.0
        %787 = vmatprep.subr.mxu0 0.0
        %788 = vmatpush1.xpose.msra.mxu0 0.0
        %789 = vmatprep.subr.mxu0 0.0
        %790 = vmatpush1.xpose.msra.mxu0 0.0
        %791 = vmatprep.subr.mxu0 0.0
        %792 = vmatpush1.xpose.msra.mxu0 0.0
        %793 = vmatprep.subr.mxu0 0.0
        %794 = vmatpush1.xpose.msra.mxu0 0.0
        %795 = vmatprep.subr.mxu0 0.0
        %796 = vmatpush1.xpose.msra.mxu0 0.0
        %797 = vmatprep.subr.mxu0 0.0
        %798 = vmatpush1.xpose.msra.mxu0 0.0
        %799 = vmatprep.subr.mxu0 0.0
        %800 = vmatpush1.xpose.msra.mxu0 0.0
        %801 = vmatprep.subr.mxu0 0.0
        %802 = vmatpush1.xpose.msra.mxu0 0.0
        %803 = vmatprep.subr.mxu0 0.0
        %804 = vmatpush1.xpose.msra.mxu0 0.0
        %805 = vmatprep.subr.mxu0 0.0
        %806 = vmatpush1.xpose.msra.mxu0 0.0
        %807 = vmatprep.subr.mxu0 0.0
        %808 = vmatpush1.xpose.msra.mxu0 0.0
        %809 = vmatprep.subr.mxu0 0.0
        %810 = vmatpush1.xpose.msra.mxu0 0.0
        %811 = vmatprep.subr.mxu0 0.0
        %812 = vmatpush1.xpose.msra.mxu0 0.0
        %813 = vmatprep.subr.mxu0 0.0
        %814 = vmatpush1.xpose.msra.mxu0 0.0
        %815 = vmatprep.subr.mxu0 0.0
        %816 = vmatpush1.xpose.msra.mxu0 0.0
        %817 = vmatprep.subr.mxu0 0.0
        %818 = vmatpush1.xpose.msra.mxu0 0.0
        %819 = vmatprep.subr.mxu0 0.0
        %820 = vmatpush1.xpose.msra.mxu0 0.0
        %821 = vmatprep.subr.mxu0 0.0
        %822 = vmatpush1.xpose.msra.mxu0 0.0
        %823 = vmatprep.subr.mxu0 0.0
        %824 = vmatpush1.xpose.msra.mxu0 0.0
        %825 = vmatprep.subr.mxu0 0.0
        %826 = vmatpush1.xpose.msra.mxu0 0.0
        %827 = vmatprep.mubr.f32.mxu0 0.0
        %828 = vmatmul.mubr.f32.gmra.mrb[0].mxu0 %v755
        %v829 = vpop.f32.mrb[0].mxu0
        %v830 = vadd.f32 0.0, %v829
        %v831 = vpop.f32.mrb[0].mxu0
        %832 = vmatprep.mubr.f32.mxu0 0.0
        %833 = vmatmul.mubr.f32.gmra.mrb[0].mxu0 %v757
        %v834 = vpop.f32.mrb[0].mxu0
        %v835 = vadd.f32 0.0, %v834
        %v836 = vpop.f32.mrb[0].mxu0
        %837 = vdwg.mxu0
        %v838 = vld [vmem:[#allocation10] sm:$0xff]
        %v839 = vld [vmem:[#allocation10 + $0x8] sm:$0xff]
        %v840 = vld [vmem:[#allocation10 + $0x10] sm:$0xff]
        %v841 = vld [vmem:[#allocation10 + $0x18] sm:$0xff]
        %v842 = vadd.f32 %v747, %v838
        %v843 = vadd.f32 %v752, %v839
        %v844 = vadd.f32 %v830, %v840
        %v845 = vadd.f32 %v835, %v841
        %v846 = vsel %vm671, %v842, -inf
        %847 = vmax.xlane.f32.xlu0 %v846
        %v848 = vpop.xlane.xlu0 %847
        %v849 = vsel %vm671, %v843, -inf
        %850 = vmax.xlane.f32.xlu0 %v849
        %v851 = vpop.xlane.xlu0 %850
        %v852 = vsel %vm671, %v844, -inf
        %853 = vmax.xlane.f32.xlu0 %v852
        %v854 = vpop.xlane.xlu0 %853
        %v855 = vsel %vm671, %v845, -inf
        %856 = vmax.xlane.f32.xlu0 %v855
        %v857 = vpop.xlane.xlu0 %856
        %v858 = vsub.f32 %v842, %v848
        %v859 = vsub.f32 %v843, %v851
        %v860 = vsub.f32 %v844, %v854
        %v861 = vsub.f32 %v845, %v857
        %v862 = vmul.f32 %v858, 1.442695
        %v863 = vpow.pop %v862
        %v864 = vmul.f32 %v859, 1.442695
        %v865 = vpow.pop %v864
        %v866 = vmul.f32 %v860, 1.442695
        %v867 = vpow.pop %v866
        %v868 = vmul.f32 %v861, 1.442695
        %v869 = vpow.pop %v868
        %v870 = vsel %vm671, %v863, 0.0
        %871 = vadd.xlane.f32.xlu0 %v870
        %v872 = vpop.xlane.xlu0 %871
        %v873 = vsel %vm671, %v865, 0.0
        %874 = vadd.xlane.f32.xlu0 %v873
        %v875 = vpop.xlane.xlu0 %874
        %v876 = vsel %vm671, %v867, 0.0
        %877 = vadd.xlane.f32.xlu0 %v876
        %v878 = vpop.xlane.xlu0 %877
        %v879 = vsel %vm671, %v869, 0.0
        %880 = vadd.xlane.f32.xlu0 %v879
        %v881 = vpop.xlane.xlu0 %880
        %v883 = vsel %vm671, %v863, 0
        %v886 = vsel %vm671, %v865, 0
        %888 = vmatprep.subr.mxu0 0.0
        %889 = vmatpush1.msra.mxu0 %v643
        %890 = vmatprep.subr.mxu0 0.0
        %891 = vmatpush1.msra.mxu0 %v648
        %892 = vmatprep.subr.mxu0 0.0
        %893 = vmatpush1.msra.mxu0 0.0
        %894 = vmatprep.subr.mxu0 0.0
        %895 = vmatpush1.msra.mxu0 0.0
        %896 = vmatprep.subr.mxu0 0.0
        %897 = vmatpush1.msra.mxu0 0.0
        %898 = vmatprep.subr.mxu0 0.0
        %899 = vmatpush1.msra.mxu0 0.0
        %900 = vmatprep.subr.mxu0 0.0
        %901 = vmatpush1.msra.mxu0 0.0
        %902 = vmatprep.subr.mxu0 0.0
        %903 = vmatpush1.msra.mxu0 0.0
        %904 = vmatprep.subr.mxu0 0.0
        %905 = vmatpush1.msra.mxu0 0.0
        %906 = vmatprep.subr.mxu0 0.0
        %907 = vmatpush1.msra.mxu0 0.0
        %908 = vmatprep.subr.mxu0 0.0
        %909 = vmatpush1.msra.mxu0 0.0
        %910 = vmatprep.subr.mxu0 0.0
        %911 = vmatpush1.msra.mxu0 0.0
        %912 = vmatprep.subr.mxu0 0.0
        %913 = vmatpush1.msra.mxu0 0.0
        %914 = vmatprep.subr.mxu0 0.0
        %915 = vmatpush1.msra.mxu0 0.0
        %916 = vmatprep.subr.mxu0 0.0
        %917 = vmatpush1.msra.mxu0 0.0
        %918 = vmatprep.subr.mxu0 0.0
        %919 = vmatpush1.msra.mxu0 0.0
        %920 = vmatprep.subr.mxu0 0.0
        %921 = vmatpush1.msra.mxu0 0.0
        %922 = vmatprep.subr.mxu0 0.0
        %923 = vmatpush1.msra.mxu0 0.0
        %924 = vmatprep.subr.mxu0 0.0
        %925 = vmatpush1.msra.mxu0 0.0
        %926 = vmatprep.subr.mxu0 0.0
        %927 = vmatpush1.msra.mxu0 0.0
        %928 = vmatprep.subr.mxu0 0.0
        %929 = vmatpush1.msra.mxu0 0.0
        %930 = vmatprep.subr.mxu0 0.0
        %931 = vmatpush1.msra.mxu0 0.0
        %932 = vmatprep.subr.mxu0 0.0
        %933 = vmatpush1.msra.mxu0 0.0
        %934 = vmatprep.subr.mxu0 0.0
        %935 = vmatpush1.msra.mxu0 0.0
        %936 = vmatprep.subr.mxu0 0.0
        %937 = vmatpush1.msra.mxu0 0.0
        %938 = vmatprep.subr.mxu0 0.0
        %939 = vmatpush1.msra.mxu0 0.0
        %940 = vmatprep.subr.mxu0 0.0
        %941 = vmatpush1.msra.mxu0 0.0
        %942 = vmatprep.subr.mxu0 0.0
        %943 = vmatpush1.msra.mxu0 0.0
        %944 = vmatprep.subr.mxu0 0.0
        %945 = vmatpush1.msra.mxu0 0.0
        %946 = vmatprep.subr.mxu0 0.0
        %947 = vmatpush1.msra.mxu0 0.0
        %948 = vmatprep.subr.mxu0 0.0
        %949 = vmatpush1.msra.mxu0 0.0
        %950 = vmatprep.subr.mxu0 0.0
        %951 = vmatpush1.msra.mxu0 0.0
        %952 = vmatprep.mubr.f32.mxu0 0.0
        %953 = vmatmul.mubr.f32.gmra.mrb[0].mxu0 %v883
        %v954 = vpop.f32.mrb[0].mxu0
        %v955 = vadd.f32 0.0, %v954
        %v956 = vpop.f32.mrb[0].mxu0
        %957 = vmatprep.mubr.f32.mxu0 0.0
        %958 = vmatmul.mubr.f32.gmra.mrb[0].mxu0 %v886
        %v959 = vpop.f32.mrb[0].mxu0
        %v960 = vadd.f32 0.0, %v959
        %v961 = vpop.f32.mrb[0].mxu0
        %962 = vdwg.mxu0
        %v964 = vsel %vm671, %v867, 0
        %v967 = vsel %vm671, %v869, 0
        %969 = vmatprep.subr.mxu0 0.0
        %970 = vmatpush1.msra.mxu0 %v666
        %971 = vmatprep.subr.mxu0 0.0
        %972 = vmatpush1.msra.mxu0 %v668
        %973 = vmatprep.subr.mxu0 0.0
        %974 = vmatpush1.msra.mxu0 0.0
        %975 = vmatprep.subr.mxu0 0.0
        %976 = vmatpush1.msra.mxu0 0.0
        %977 = vmatprep.subr.mxu0 0.0
        %978 = vmatpush1.msra.mxu0 0.0
        %979 = vmatprep.subr.mxu0 0.0
        %980 = vmatpush1.msra.mxu0 0.0
        %981 = vmatprep.subr.mxu0 0.0
        %982 = vmatpush1.msra.mxu0 0.0
        %983 = vmatprep.subr.mxu0 0.0
        %984 = vmatpush1.msra.mxu0 0.0
        %985 = vmatprep.subr.mxu0 0.0
        %986 = vmatpush1.msra.mxu0 0.0
        %987 = vmatprep.subr.mxu0 0.0
        %988 = vmatpush1.msra.mxu0 0.0
        %989 = vmatprep.subr.mxu0 0.0
        %990 = vmatpush1.msra.mxu0 0.0
        %991 = vmatprep.subr.mxu0 0.0
        %992 = vmatpush1.msra.mxu0 0.0
        %993 = vmatprep.subr.mxu0 0.0
        %994 = vmatpush1.msra.mxu0 0.0
        %995 = vmatprep.subr.mxu0 0.0
        %996 = vmatpush1.msra.mxu0 0.0
        %997 = vmatprep.subr.mxu0 0.0
        %998 = vmatpush1.msra.mxu0 0.0
        %999 = vmatprep.subr.mxu0 0.0
        %1000 = vmatpush1.msra.mxu0 0.0
        %1001 = vmatprep.subr.mxu0 0.0
        %1002 = vmatpush1.msra.mxu0 0.0
        %1003 = vmatprep.subr.mxu0 0.0
        %1004 = vmatpush1.msra.mxu0 0.0
        %1005 = vmatprep.subr.mxu0 0.0
        %1006 = vmatpush1.msra.mxu0 0.0
        %1007 = vmatprep.subr.mxu0 0.0
        %1008 = vmatpush1.msra.mxu0 0.0
        %1009 = vmatprep.subr.mxu0 0.0
        %1010 = vmatpush1.msra.mxu0 0.0
        %1011 = vmatprep.subr.mxu0 0.0
        %1012 = vmatpush1.msra.mxu0 0.0
        %1013 = vmatprep.subr.mxu0 0.0
        %1014 = vmatpush1.msra.mxu0 0.0
        %1015 = vmatprep.subr.mxu0 0.0
        %1016 = vmatpush1.msra.mxu0 0.0
        %1017 = vmatprep.subr.mxu0 0.0
        %1018 = vmatpush1.msra.mxu0 0.0
        %1019 = vmatprep.subr.mxu0 0.0
        %1020 = vmatpush1.msra.mxu0 0.0
        %1021 = vmatprep.subr.mxu0 0.0
        %1022 = vmatpush1.msra.mxu0 0.0
        %1023 = vmatprep.subr.mxu0 0.0
        %1024 = vmatpush1.msra.mxu0 0.0
        %1025 = vmatprep.subr.mxu0 0.0
        %1026 = vmatpush1.msra.mxu0 0.0
        %1027 = vmatprep.subr.mxu0 0.0
        %1028 = vmatpush1.msra.mxu0 0.0
        %1029 = vmatprep.subr.mxu0 0.0
        %1030 = vmatpush1.msra.mxu0 0.0
        %1031 = vmatprep.subr.mxu0 0.0
        %1032 = vmatpush1.msra.mxu0 0.0
        %1033 = vmatprep.mubr.f32.mxu0 0.0
        %1034 = vmatmul.mubr.f32.gmra.mrb[0].mxu0 %v964
        %v1035 = vpop.f32.mrb[0].mxu0
        %v1036 = vadd.f32 0.0, %v1035
        %v1037 = vpop.f32.mrb[0].mxu0
        %1038 = vmatprep.mubr.f32.mxu0 0.0
        %1039 = vmatmul.mubr.f32.gmra.mrb[0].mxu0 %v967
        %v1040 = vpop.f32.mrb[0].mxu0
        %v1041 = vadd.f32 0.0, %v1040
        %v1042 = vpop.f32.mrb[0].mxu0
        %1043 = vdwg.mxu0
        %v1044 = vrcp.pop %v872
        %v1045 = vrcp.pop %v875
        %v1046 = vrcp.pop %v878
        %v1047 = vrcp.pop %v881
        %v1048 = vmul.f32 %v955, %v1044
        %v1049 = vmul.f32 %v960, %v1045
        %v1050 = vmul.f32 %v1036, %v1046
        %v1051 = vmul.f32 %v1041, %v1047
        %1054 = vrot.lane.b32.xlu0 %v1050, 16
        %v1055 = vpop.permute.xlu0 %1054
        %1056 = vrot.lane.b32.xlu0 %v1051, 16
        %v1057 = vpop.permute.xlu0 %1056
        %v1060 = vsel %vm671, %v1048, %v1055
        %v1061 = vsel %vm671, %v1049, %v1057
        %1062 = vst.msk [vmem:[%s381] sm:$0xff] %vm397, %v1060
        %1063 = vst.msk [vmem:[%s381 + $0x8] sm:$0xff] %vm397, %v1061
        %s1064 = sand.u32 %s208, 1
        %s1065 = scalar_lea.sflag [#allocation4], %s1064
        %s1066 = sand.u32 %s208, 1
        %s1067 = smul.addr %s1066, 16
        %s1068 = scalar_lea.vmem [#allocation11], %s1067
        // Predicated region
        $region73: #{tpu_custom_call.1} parent=51 // pred_check
          %p1069 = pneg %p218
        $region74: #{tpu_custom_call.1} parent=51 // pred_check_branch
          %1071 = sbr.rel (%p1069) target = $region76
        $region75: #{tpu_custom_call.1} parent=51 // pred_region
          %s1072 = smul.u32 2, %s27
          %s1074 = ssub.s32 256, 256
          %1075 = vsyncadd %s1065, %s1074
          %s1076 = smul.addr %s1072, 128
          %s1077 = scalar_lea.hbm %s8, %s1076
          %s1078 = sshll.u32 %s1068, 4
          %s1079 = int_to_ptr.vmem [resolvable:$true] %s1078
          %1084 = dma.vmem_to_hbm [thread:$0]  %s1079, 256, %s1077, %s1065, 128, 128, 8
        $region76: #{tpu_custom_call.1} parent=51 // pred_fallthru
          _
      $region52: #{tpu_custom_call.1} parent=5 // pred_fallthru
        _
      %p1085 = scmp.le.s32.totalorder 2, %s22
      // Predicated region
      $region77: #{tpu_custom_call.1} parent=5 // pred_check
        %p1086 = pneg %p1085
      $region78: #{tpu_custom_call.1} parent=5 // pred_check_branch
        %1088 = sbr.rel (%p1086) target = $region80
      $region79: #{tpu_custom_call.1} parent=5 // pred_region
        %s1089 = ssub.s32 %s22, 2
        // Predicated region
        $region81: #{tpu_custom_call.1} parent=79 // pred_check
          %p1090 = pneg %p224
        $region82: #{tpu_custom_call.1} parent=79 // pred_check_branch
          %1092 = sbr.rel (%p1090) target = $region84
        $region83: #{tpu_custom_call.1} parent=79 // pred_region
          %s1093 = sand.u32 %s209, 1
          %s1094 = scalar_lea.sflag [#allocation4], %s1093
          %s1095 = sand.u32 %s209, 1
          %s1096 = smul.addr %s1095, 16
          %s1097 = scalar_lea.vmem [#allocation11], %s1096
          %1098 = dma.done %s1094, 256
        $region84: #{tpu_custom_call.1} parent=79 // pred_fallthru
          _
      $region80: #{tpu_custom_call.1} parent=5 // pred_fallthru
        _
    $region6: #{tpu_custom_call.1} parent=1 // loop_footer
      %s26 = sadd.s32 1, %s22
    $region7: #{tpu_custom_call.1} parent=1 // loop_footer_branch
      %21 = sbr.rel target = $region3
    $region8: #{tpu_custom_call.1} parent=1 // loop_exit
      _
    %1099 = vsyncpa [#allocation3], 1
    %s1100 = scalar_lea.sflag [#allocation3], 1
    %1101 = vsyncpa %s1100, 1
    %1102 = vsyncpa [#allocation6], 1
    %1103 = vsyncpa [#allocation9], 1
    %1104 = vsyncpa [#allocation4], 1
    %s1105 = scalar_lea.sflag [#allocation4], 1
    %1106 = vsyncpa %s1105, 1

// kernel: tpu_custom_call.1
$region0: #{tpu_custom_call.1}
  #allocation0 [shape = 'u32[]', space=smem, size = 0x4, offset = 0x4, fixed_abs, tag = 'smem constant byte address 0x4 - core index']
  #allocation1 [shape = 'u32[144,128]{1,0:T(1,128)}', space=vmem, size = 0x12000, scoped, tag = 'internal scratch']
  %s0 = inlined_call_operand.hbm [shape: f32[32,32], index: 0, kind: input, shape index: {}]
  %s1 = inlined_call_operand.hbm [shape: f32[32,32], index: 1, kind: input, shape index: {}]
  %s2 = inlined_call_operand.hbm [shape: f32[32,32], index: 2, kind: input, shape index: {}]
  %s3 = inlined_call_operand.hbm [shape: f32[32,32], index: 3, kind: input, shape index: {}]
  %s4 = inlined_call_operand.vmem [shape: f32[1,32], index: 4, kind: input, shape index: {}]
  %s5 = inlined_call_operand.vmem [shape: f32[1,32], index: 5, kind: input, shape index: {}]
  %s6 = inlined_call_operand.vmem [shape: f32[1,32], index: 6, kind: input, shape index: {}]
  %s7 = inlined_call_operand.hbm [shape: f32[2,1,16,16], index: 7, kind: input, shape index: {}]
  %s8 = inlined_call_operand.hbm [shape: f32[32,32], index: 8, kind: output, shape index: {}]
  %s9 = sld [smem:[#allocation0]]
  $region85: #{tpu_custom_call.1} parent=0
    _
  %s11 = ssub.s32 1, %s9
  %s12 = scalar_select 0, %s11, %s9
  $region1: #{tpu_custom_call.1} parent=0
    #allocation2 [shape = 'u8[16384]{0}', space=vmem, size = 0x4000, scoped, tag = 'input window, operand 0']
    #allocation3 [shape = 's32[2]{0}', space=sflag, size = 0x8, scoped, tag = 'scoped memory for tpu_custom_call.1']
    #allocation4 [shape = 's32[2]{0}', space=sflag, size = 0x8, scoped, tag = 'scoped memory for tpu_custom_call.1']
    #allocation5 [shape = 'u8[16384]{0}', space=vmem, size = 0x4000, scoped, tag = 'input window, operand 1, single buffered']
    #allocation6 [shape = 's32[1]{0}', space=sflag, size = 0x4, scoped, tag = 'scoped memory for tpu_custom_call.1']
    #allocation7 [shape = 'u8[16384]{0}', space=vmem, size = 0x4000, scoped, tag = 'input window, operand 2, single buffered']
    #allocation8 [shape = 'u8[16384]{0}', space=vmem, size = 0x4000, scoped, tag = 'input window, operand 3, single buffered']
    #allocation9 [shape = 's32[1]{0}', space=sflag, size = 0x4, scoped, tag = 'scoped memory for tpu_custom_call.1']
    #allocation10 [shape = 'u8[16384]{0}', space=vmem, size = 0x4000, scoped, tag = 'input window, operand 7, single buffered']
    #allocation11 [shape = 'u8[16384]{0}', space=vmem, size = 0x4000, scoped, tag = 'output window, operand 0']
    %13 = vsyncpa [#allocation3], 0
    %s14 = scalar_lea.sflag [#allocation3], 1
    %15 = vsyncpa %s14, 0
    %16 = vsyncpa [#allocation6], 0
    %17 = vsyncpa [#allocation9], 0
    %18 = vsyncpa [#allocation4], 0
    %s19 = scalar_lea.sflag [#allocation4], 1
    %20 = vsyncpa %s19, 0
    loop: start=0, step=1, limit=4
    $region2: #{tpu_custom_call.1} parent=1 // loop_pre_header
      _
    $region3: #{tpu_custom_call.1} parent=1 // loop_header
      %s22 = sphi 0, %s26
      %p23 = scmp.ge.s32.totalorder %s22, 4
      %s32 = sphi 0, %s34
      %s35 = sphi 0, %s32
      %s36 = sphi 0, %s35
      %s52 = sphi 0, %s36
      %s56 = sphi 0, %s56
      %s58 = sphi 0, %s56
      %s59 = sphi 0, %s58
      %s73 = sphi 0, %s59
      %s77 = sphi 0, %s77
      %s79 = sphi 0, %s77
      %s80 = sphi 0, %s79
      %s94 = sphi 0, %s80
      %s98 = sphi 0, %s98
      %s100 = sphi 0, %s98
      %s101 = sphi 0, %s100
      %s115 = sphi 0, %s101
      %s119 = sphi 0, %s119
      %s121 = sphi 0, %s119
      %s122 = sphi 0, %s121
      %s136 = sphi 0, %s122
      %s140 = sphi 0, %s140
      %s142 = sphi 0, %s140
      %s143 = sphi 0, %s142
      %s157 = sphi 0, %s143
      %s161 = sphi 0, %s161
      %s163 = sphi 0, %s161
      %s164 = sphi 0, %s163
      %s178 = sphi 0, %s164
      %s182 = sphi 0, %s182
      %s184 = sphi 0, %s182
      %s185 = sphi 0, %s184
      %s199 = sphi 0, %s185
      %s205 = sphi 0, %s207
      %s208 = sphi 0, %s205
      %s209 = sphi 0, %s208
      %s225 = sphi 0, %s209
    $region4: #{tpu_custom_call.1} parent=1 // loop_header_branch
      %25 = sbr.rel (%p23) target = $region8
    $region5: #{tpu_custom_call.1} parent=1 // loop_body
      %s27 = ssub.s32 %s22, 1
      %s28 = ssub.s32 %s22, 2
      %s29 = sadd.s32 %s22, 1
      %s30 = ssub.s32 %s22, %s29
      %p31 = scmp.eq.s32.totalorder %s30, 0
      %s33 = sadd.s32 %s32, 1
      %s34 = scalar_select %p31, %s32, %s33
      %p37 = pneg %p31
      %p38 = scmp.eq.s32.totalorder %s22, 1
      %p39 = por %p37, %p38
      %p40 = scmp.ne.s32.totalorder %s32, %s35
      %p41 = scmp.eq.s32.totalorder %s22, 0
      %p42 = por %p40, %p41
      %p43 = scmp.ne.s32.totalorder %s32, %s35
      %p44 = scmp.eq.s32.totalorder %s27, 1
      %p45 = por %p43, %p44
      %p46 = scmp.ne.s32.totalorder %s35, %s36
      %p47 = scmp.eq.s32.totalorder %s27, 0
      %p48 = por %p46, %p47
      %p49 = scmp.ne.s32.totalorder %s35, %s36
      %p50 = scmp.eq.s32.totalorder %s28, 1
      %p51 = por %p49, %p50
      %p53 = scmp.ne.s32.totalorder %s36, %s52
      %p54 = scmp.eq.s32.totalorder %s28, 0
      %p55 = por %p53, %p54
      %s57 = sadd.s32 %s56, 1
      %p60 = scmp.eq.s32.totalorder %s22, 1
      %p61 = scmp.ne.s32.totalorder %s56, %s58
      %p62 = scmp.eq.s32.totalorder %s22, 0
      %p63 = por %p61, %p62
      %p64 = scmp.ne.s32.totalorder %s56, %s58
      %p65 = scmp.eq.s32.totalorder %s27, 1
      %p66 = por %p64, %p65
      %p67 = scmp.ne.s32.totalorder %s58, %s59
      %p68 = scmp.eq.s32.totalorder %s27, 0
      %p69 = por %p67, %p68
      %p70 = scmp.ne.s32.totalorder %s58, %s59
      %p71 = scmp.eq.s32.totalorder %s28, 1
      %p72 = por %p70, %p71
      %p74 = scmp.ne.s32.totalorder %s59, %s73
      %p75 = scmp.eq.s32.totalorder %s28, 0
      %p76 = por %p74, %p75
      %s78 = sadd.s32 %s77, 1
      %p81 = scmp.eq.s32.totalorder %s22, 1
      %p82 = scmp.ne.s32.totalorder %s77, %s79
      %p83 = scmp.eq.s32.totalorder %s22, 0
      %p84 = por %p82, %p83
      %p85 = scmp.ne.s32.totalorder %s77, %s79
      %p86 = scmp.eq.s32.totalorder %s27, 1
      %p87 = por %p85, %p86
      %p88 = scmp.ne.s32.totalorder %s79, %s80
      %p89 = scmp.eq.s32.totalorder %s27, 0
      %p90 = por %p88, %p89
      %p91 = scmp.ne.s32.totalorder %s79, %s80
      %p92 = scmp.eq.s32.totalorder %s28, 1
      %p93 = por %p91, %p92
      %p95 = scmp.ne.s32.totalorder %s80, %s94
      %p96 = scmp.eq.s32.totalorder %s28, 0
      %p97 = por %p95, %p96
      %s99 = sadd.s32 %s98, 1
      %p102 = scmp.eq.s32.totalorder %s22, 1
      %p103 = scmp.ne.s32.totalorder %s98, %s100
      %p104 = scmp.eq.s32.totalorder %s22, 0
      %p105 = por %p103, %p104
      %p106 = scmp.ne.s32.totalorder %s98, %s100
      %p107 = scmp.eq.s32.totalorder %s27, 1
      %p108 = por %p106, %p107
      %p109 = scmp.ne.s32.totalorder %s100, %s101
      %p110 = scmp.eq.s32.totalorder %s27, 0
      %p111 = por %p109, %p110
      %p112 = scmp.ne.s32.totalorder %s100, %s101
      %p113 = scmp.eq.s32.totalorder %s28, 1
      %p114 = por %p112, %p113
      %p116 = scmp.ne.s32.totalorder %s101, %s115
      %p117 = scmp.eq.s32.totalorder %s28, 0
      %p118 = por %p116, %p117
      %s120 = sadd.s32 %s119, 1
      %p123 = scmp.eq.s32.totalorder %s22, 1
      %p124 = scmp.ne.s32.totalorder %s119, %s121
      %p125 = scmp.eq.s32.totalorder %s22, 0
      %p126 = por %p124, %p125
      %p127 = scmp.ne.s32.totalorder %s119, %s121
      %p128 = scmp.eq.s32.totalorder %s27, 1
      %p129 = por %p127, %p128
      %p130 = scmp.ne.s32.totalorder %s121, %s122
      %p131 = scmp.eq.s32.totalorder %s27, 0
      %p132 = por %p130, %p131
      %p133 = scmp.ne.s32.totalorder %s121, %s122
      %p134 = scmp.eq.s32.totalorder %s28, 1
      %p135 = por %p133, %p134
      %p137 = scmp.ne.s32.totalorder %s122, %s136
      %p138 = scmp.eq.s32.totalorder %s28, 0
      %p139 = por %p137, %p138
      %s141 = sadd.s32 %s140, 1
      %p144 = scmp.eq.s32.totalorder %s22, 1
      %p145 = scmp.ne.s32.totalorder %s140, %s142
      %p146 = scmp.eq.s32.totalorder %s22, 0
      %p147 = por %p145, %p146
      %p148 = scmp.ne.s32.totalorder %s140, %s142
      %p149 = scmp.eq.s32.totalorder %s27, 1
      %p150 = por %p148, %p149
      %p151 = scmp.ne.s32.totalorder %s142, %s143
      %p152 = scmp.eq.s32.totalorder %s27, 0
      %p153 = por %p151, %p152
      %p154 = scmp.ne.s32.totalorder %s142, %s143
      %p155 = scmp.eq.s32.totalorder %s28, 1
      %p156 = por %p154, %p155
      %p158 = scmp.ne.s32.totalorder %s143, %s157
      %p159 = scmp.eq.s32.totalorder %s28, 0
      %p160 = por %p158, %p159
      %s162 = sadd.s32 %s161, 1
      %p165 = scmp.eq.s32.totalorder %s22, 1
      %p166 = scmp.ne.s32.totalorder %s161, %s163
      %p167 = scmp.eq.s32.totalorder %s22, 0
      %p168 = por %p166, %p167
      %p169 = scmp.ne.s32.totalorder %s161, %s163
      %p170 = scmp.eq.s32.totalorder %s27, 1
      %p171 = por %p169, %p170
      %p172 = scmp.ne.s32.totalorder %s163, %s164
      %p173 = scmp.eq.s32.totalorder %s27, 0
      %p174 = por %p172, %p173
      %p175 = scmp.ne.s32.totalorder %s163, %s164
      %p176 = scmp.eq.s32.totalorder %s28, 1
      %p177 = por %p175, %p176
      %p179 = scmp.ne.s32.totalorder %s164, %s178
      %p180 = scmp.eq.s32.totalorder %s28, 0
      %p181 = por %p179, %p180
      %s183 = sadd.s32 %s182, 1
      %p186 = scmp.eq.s32.totalorder %s22, 1
      %p187 = scmp.ne.s32.totalorder %s182, %s184
      %p188 = scmp.eq.s32.totalorder %s22, 0
      %p189 = por %p187, %p188
      %p190 = scmp.ne.s32.totalorder %s182, %s184
      %p191 = scmp.eq.s32.totalorder %s27, 1
      %p192 = por %p190, %p191
      %p193 = scmp.ne.s32.totalorder %s184, %s185
      %p194 = scmp.eq.s32.totalorder %s27, 0
      %p195 = por %p193, %p194
      %p196 = scmp.ne.s32.totalorder %s184, %s185
      %p197 = scmp.eq.s32.totalorder %s28, 1
      %p198 = por %p196, %p197
      %p200 = scmp.ne.s32.totalorder %s185, %s199
      %p201 = scmp.eq.s32.totalorder %s28, 0
      %p202 = por %p200, %p201
      %s203 = ssub.s32 %s22, %s29
      %p204 = scmp.eq.s32.totalorder %s203, 0
      %s206 = sadd.s32 %s205, 1
      %s207 = scalar_select %p204, %s205, %s206
      %p210 = pneg %p204
      %p211 = scmp.eq.s32.totalorder %s22, 1
      %p212 = por %p210, %p211
      %p213 = scmp.ne.s32.totalorder %s205, %s208
      %p214 = scmp.eq.s32.totalorder %s22, 0
      %p215 = por %p213, %p214
      %p216 = scmp.ne.s32.totalorder %s205, %s208
      %p217 = scmp.eq.s32.totalorder %s27, 1
      %p218 = por %p216, %p217
      %p219 = scmp.ne.s32.totalorder %s208, %s209
      %p220 = scmp.eq.s32.totalorder %s27, 0
      %p221 = por %p219, %p220
      %p222 = scmp.ne.s32.totalorder %s208, %s209
      %p223 = scmp.eq.s32.totalorder %s28, 1
      %p224 = por %p222, %p223
      %p226 = scmp.ne.s32.totalorder %s209, %s225
      %p227 = scmp.eq.s32.totalorder %s28, 0
      %p228 = por %p226, %p227
      %p229 = scmp.le.s32.totalorder 1, %s22
      %p230 = scmp.lt.s32.totalorder %s22, 3
      %p231 = pnand %p229, %p230
      %p232 = pneg %p231
      // Predicated region
      $region9: #{tpu_custom_call.1} parent=5 // pred_check
        _
      $region10: #{tpu_custom_call.1} parent=5 // pred_check_branch
        %234 = sbr.rel (%p231) target = $region12
      $region11: #{tpu_custom_call.1} parent=5 // pred_region
        %s235 = ssub.s32 %s22, 1
        // Predicated region
        $region13: #{tpu_custom_call.1} parent=11 // pred_check
          %p236 = pneg %p69
        $region14: #{tpu_custom_call.1} parent=11 // pred_check_branch
          %238 = sbr.rel (%p236) target = $region16
        $region15: #{tpu_custom_call.1} parent=11 // pred_region
          %s240 = ssub.s32 512, 512
          %241 = vsyncadd [#allocation6], %s240
          %s242 = sshll.u32 [#allocation5], 4
          %s243 = int_to_ptr.vmem [resolvable:$true] %s242
          %248 = dma.hbm_to_vmem [thread:$0]  %s1, 512, %s243, [#allocation6], 128, 128, 8
        $region16: #{tpu_custom_call.1} parent=11 // pred_fallthru
          _
        // Predicated region
        $region17: #{tpu_custom_call.1} parent=11 // pred_check
          %p249 = pneg %p90
        $region18: #{tpu_custom_call.1} parent=11 // pred_check_branch
          %251 = sbr.rel (%p249) target = $region20
        $region19: #{tpu_custom_call.1} parent=11 // pred_region
          %s253 = ssub.s32 512, 512
          %254 = vsyncadd [#allocation6], %s253
          %s255 = sshll.u32 [#allocation7], 4
          %s256 = int_to_ptr.vmem [resolvable:$true] %s255
          %261 = dma.hbm_to_vmem [thread:$0]  %s2, 512, %s256, [#allocation6], 128, 128, 8
        $region20: #{tpu_custom_call.1} parent=11 // pred_fallthru
          _
        // Predicated region
        $region21: #{tpu_custom_call.1} parent=11 // pred_check
          %p262 = pneg %p111
        $region22: #{tpu_custom_call.1} parent=11 // pred_check_branch
          %264 = sbr.rel (%p262) target = $region24
        $region23: #{tpu_custom_call.1} parent=11 // pred_region
          %s266 = ssub.s32 512, 512
          %267 = vsyncadd [#allocation9], %s266
          %s268 = sshll.u32 [#allocation8], 4
          %s269 = int_to_ptr.vmem [resolvable:$true] %s268
          %274 = dma.hbm_to_vmem [thread:$0]  %s3, 512, %s269, [#allocation9], 128, 128, 8
        $region24: #{tpu_custom_call.1} parent=11 // pred_fallthru
          _
        // Predicated region
        $region25: #{tpu_custom_call.1} parent=11 // pred_check
          %p275 = pneg %p132
        $region26: #{tpu_custom_call.1} parent=11 // pred_check_branch
          %277 = sbr.rel (%p275) target = $region28
        $region27: #{tpu_custom_call.1} parent=11 // pred_region
          _
        $region28: #{tpu_custom_call.1} parent=11 // pred_fallthru
          _
        // Predicated region
        $region29: #{tpu_custom_call.1} parent=11 // pred_check
          %p278 = pneg %p153
        $region30: #{tpu_custom_call.1} parent=11 // pred_check_branch
          %280 = sbr.rel (%p278) target = $region32
        $region31: #{tpu_custom_call.1} parent=11 // pred_region
          _
        $region32: #{tpu_custom_call.1} parent=11 // pred_fallthru
          _
        // Predicated region
        $region33: #{tpu_custom_call.1} parent=11 // pred_check
          %p281 = pneg %p174
        $region34: #{tpu_custom_call.1} parent=11 // pred_check_branch
          %283 = sbr.rel (%p281) target = $region36
        $region35: #{tpu_custom_call.1} parent=11 // pred_region
          _
        $region36: #{tpu_custom_call.1} parent=11 // pred_fallthru
          _
        // Predicated region
        $region37: #{tpu_custom_call.1} parent=11 // pred_check
          %p284 = pneg %p195
        $region38: #{tpu_custom_call.1} parent=11 // pred_check_branch
          %286 = sbr.rel (%p284) target = $region40
        $region39: #{tpu_custom_call.1} parent=11 // pred_region
          %s288 = ssub.s32 512, 512
          %289 = vsyncadd [#allocation9], %s288
          %s290 = sshll.u32 [#allocation10], 4
          %s291 = int_to_ptr.vmem [resolvable:$true] %s290
          %296 = dma.hbm_to_vmem [thread:$0]  %s7, 512, %s291, [#allocation9], 128, 128, 8
        $region40: #{tpu_custom_call.1} parent=11 // pred_fallthru
          _
      $region12: #{tpu_custom_call.1} parent=5 // pred_fallthru
        _
      %p297 = scmp.lt.s32.totalorder %s22, 2
      // Predicated region
      $region41: #{tpu_custom_call.1} parent=5 // pred_check
        %p298 = pneg %p297
      $region42: #{tpu_custom_call.1} parent=5 // pred_check_branch
        %300 = sbr.rel (%p298) target = $region44
      $region43: #{tpu_custom_call.1} parent=5 // pred_region
        // Predicated region
        $region45: #{tpu_custom_call.1} parent=43 // pred_check
          %p301 = pneg %p42
        $region46: #{tpu_custom_call.1} parent=43 // pred_check_branch
          %303 = sbr.rel (%p301) target = $region48
        $region47: #{tpu_custom_call.1} parent=43 // pred_region
          %s304 = sand.u32 %s32, 1
          %s305 = scalar_lea.sflag [#allocation3], %s304
          %s306 = sand.u32 %s32, 1
          %s307 = smul.addr %s306, 16
          %s308 = scalar_lea.vmem [#allocation2], %s307
          %s309 = smul.u32 2, %s22
          %s311 = ssub.s32 256, 256
          %312 = vsyncadd %s305, %s311
          %s313 = smul.addr %s309, 128
          %s314 = scalar_lea.hbm %s0, %s313
          %s315 = sshll.u32 %s308, 4
          %s316 = int_to_ptr.vmem [resolvable:$true] %s315
          %321 = dma.hbm_to_vmem [thread:$0]  %s314, 256, %s316, %s305, 128, 128, 8
        $region48: #{tpu_custom_call.1} parent=43 // pred_fallthru
          _
      $region44: #{tpu_custom_call.1} parent=5 // pred_fallthru
        _
      %p322 = scmp.le.s32.totalorder 1, %s22
      %p323 = scmp.lt.s32.totalorder %s22, 3
      %p324 = pnand %p322, %p323
      %p325 = pneg %p324
      // Predicated region
      $region49: #{tpu_custom_call.1} parent=5 // pred_check
        _
      $region50: #{tpu_custom_call.1} parent=5 // pred_check_branch
        %327 = sbr.rel (%p324) target = $region52
      $region51: #{tpu_custom_call.1} parent=5 // pred_region
        %s328 = ssub.s32 %s22, 1
        %s329 = sand.u32 %s35, 1
        %s330 = scalar_lea.sflag [#allocation3], %s329
        %s331 = sand.u32 %s35, 1
        %s332 = smul.addr %s331, 16
        %s333 = scalar_lea.vmem [#allocation2], %s332
        // Predicated region
        $region53: #{tpu_custom_call.1} parent=51 // pred_check
          %p334 = pneg %p48
        $region54: #{tpu_custom_call.1} parent=51 // pred_check_branch
          %336 = sbr.rel (%p334) target = $region56
        $region55: #{tpu_custom_call.1} parent=51 // pred_region
          %337 = dma.done %s330, 256
        $region56: #{tpu_custom_call.1} parent=51 // pred_fallthru
          _
        // Predicated region
        $region57: #{tpu_custom_call.1} parent=51 // pred_check
          %p338 = pneg %p69
        $region58: #{tpu_custom_call.1} parent=51 // pred_check_branch
          %340 = sbr.rel (%p338) target = $region60
        $region59: #{tpu_custom_call.1} parent=51 // pred_region
          %341 = dma.done [#allocation6], 512
        $region60: #{tpu_custom_call.1} parent=51 // pred_fallthru
          _
        // Predicated region
        $region61: #{tpu_custom_call.1} parent=51 // pred_check
          %p342 = pneg %p90
        $region62: #{tpu_custom_call.1} parent=51 // pred_check_branch
          %344 = sbr.rel (%p342) target = $region64
        $region63: #{tpu_custom_call.1} parent=51 // pred_region
          %345 = dma.done [#allocation6], 512
        $region64: #{tpu_custom_call.1} parent=51 // pred_fallthru
          _
        // Predicated region
        $region65: #{tpu_custom_call.1} parent=51 // pred_check
          %p346 = pneg %p111
        $region66: #{tpu_custom_call.1} parent=51 // pred_check_branch
          %348 = sbr.rel (%p346) target = $region68
        $region67: #{tpu_custom_call.1} parent=51 // pred_region
          %349 = dma.done [#allocation9], 512
        $region68: #{tpu_custom_call.1} parent=51 // pred_fallthru
          _
        // Predicated region
        $region69: #{tpu_custom_call.1} parent=51 // pred_check
          %p350 = pneg %p195
        $region70: #{tpu_custom_call.1} parent=51 // pred_check_branch
          %352 = sbr.rel (%p350) target = $region72
        $region71: #{tpu_custom_call.1} parent=51 // pred_region
          %353 = dma.done [#allocation9], 512
        $region72: #{tpu_custom_call.1} parent=51 // pred_fallthru
          _
        %s354 = sand.u32 %s35, 1
        %s355 = scalar_lea.sflag [#allocation3], %s354
        %s356 = sand.u32 %s35, 1
        %s357 = smul.addr %s356, 16
        %s358 = scalar_lea.vmem [#allocation2], %s357
        %p359 = pneg %p48
        %p360 = pneg %p45
        %p361 = pneg %p69
        %p362 = pneg %p66
        %p363 = pneg %p90
        %p364 = pneg %p87
        %p365 = pneg %p111
        %p366 = pneg %p108
        %p367 = pneg %p132
        %p368 = pneg %p129
        %p369 = pneg %p153
        %p370 = pneg %p150
        %p371 = pneg %p174
        %p372 = pneg %p171
        %p373 = pneg %p195
        %p374 = pneg %p192
        %p375 = pneg %p221
        %p376 = pneg %p218
        %s377 = sand.u32 %s208, 1
        %s378 = scalar_lea.sflag [#allocation4], %s377
        %s379 = sand.u32 %s208, 1
        %s380 = smul.addr %s379, 16
        %s381 = scalar_lea.vmem [#allocation11], %s380
        %s382 = smul.u32 2, %s27
        %s383 = smul.u32 2, %s27
        %v384 = vld [vmem:[%s333] sm:$0xff]
        %v385 = vld [vmem:[%s333 + $0x8] sm:$0xff]
        %v386 = vld [vmem:[#allocation5] sm:$0xff]
        %v387 = vld [vmem:[#allocation5 + $0x8] sm:$0xff]
        %v388 = vld [vmem:[#allocation5 + $0x10] sm:$0xff]
        %v389 = vld [vmem:[#allocation5 + $0x18] sm:$0xff]
        %v390 = vld [vmem:[%s4] sm:$0x1]
        %v392 = vlaneseq
        %v393 = vshrl.u32 %v392, 7
        %v394 = vsub.s32 0, %v393
        %v395 = vrot.slane %v390, %v394
        %vm397 = vcmask 261120
        %v399 = vsel %vm397, %v384, 0
        %v402 = vsel %vm397, %v385, 0
        %404 = vmatprep.subr.mxu0 0.0
        %405 = vmatpush1.msra.mxu0 %v386
        %406 = vmatprep.subr.mxu0 0.0
        %407 = vmatpush1.msra.mxu0 %v387
        %408 = vmatprep.subr.mxu0 0.0
        %409 = vmatpush1.msra.mxu0 %v388
        %410 = vmatprep.subr.mxu0 0.0
        %411 = vmatpush1.msra.mxu0 %v389
        %412 = vmatprep.subr.mxu0 0.0
        %413 = vmatpush1.msra.mxu0 0.0
        %414 = vmatprep.subr.mxu0 0.0
        %415 = vmatpush1.msra.mxu0 0.0
        %416 = vmatprep.subr.mxu0 0.0
        %417 = vmatpush1.msra.mxu0 0.0
        %418 = vmatprep.subr.mxu0 0.0
        %419 = vmatpush1.msra.mxu0 0.0
        %420 = vmatprep.subr.mxu0 0.0
        %421 = vmatpush1.msra.mxu0 0.0
        %422 = vmatprep.subr.mxu0 0.0
        %423 = vmatpush1.msra.mxu0 0.0
        %424 = vmatprep.subr.mxu0 0.0
        %425 = vmatpush1.msra.mxu0 0.0
        %426 = vmatprep.subr.mxu0 0.0
        %427 = vmatpush1.msra.mxu0 0.0
        %428 = vmatprep.subr.mxu0 0.0
        %429 = vmatpush1.msra.mxu0 0.0
        %430 = vmatprep.subr.mxu0 0.0
        %431 = vmatpush1.msra.mxu0 0.0
        %432 = vmatprep.subr.mxu0 0.0
        %433 = vmatpush1.msra.mxu0 0.0
        %434 = vmatprep.subr.mxu0 0.0
        %435 = vmatpush1.msra.mxu0 0.0
        %436 = vmatprep.subr.mxu0 0.0
        %437 = vmatpush1.msra.mxu0 0.0
        %438 = vmatprep.subr.mxu0 0.0
        %439 = vmatpush1.msra.mxu0 0.0
        %440 = vmatprep.subr.mxu0 0.0
        %441 = vmatpush1.msra.mxu0 0.0
        %442 = vmatprep.subr.mxu0 0.0
        %443 = vmatpush1.msra.mxu0 0.0
        %444 = vmatprep.subr.mxu0 0.0
        %445 = vmatpush1.msra.mxu0 0.0
        %446 = vmatprep.subr.mxu0 0.0
        %447 = vmatpush1.msra.mxu0 0.0
        %448 = vmatprep.subr.mxu0 0.0
        %449 = vmatpush1.msra.mxu0 0.0
        %450 = vmatprep.subr.mxu0 0.0
        %451 = vmatpush1.msra.mxu0 0.0
        %452 = vmatprep.subr.mxu0 0.0
        %453 = vmatpush1.msra.mxu0 0.0
        %454 = vmatprep.subr.mxu0 0.0
        %455 = vmatpush1.msra.mxu0 0.0
        %456 = vmatprep.subr.mxu0 0.0
        %457 = vmatpush1.msra.mxu0 0.0
        %458 = vmatprep.subr.mxu0 0.0
        %459 = vmatpush1.msra.mxu0 0.0
        %460 = vmatprep.subr.mxu0 0.0
        %461 = vmatpush1.msra.mxu0 0.0
        %462 = vmatprep.subr.mxu0 0.0
        %463 = vmatpush1.msra.mxu0 0.0
        %464 = vmatprep.subr.mxu0 0.0
        %465 = vmatpush1.msra.mxu0 0.0
        %466 = vmatprep.subr.mxu0 0.0
        %467 = vmatpush1.msra.mxu0 0.0
        %468 = vmatprep.mubr.f32.mxu0 0.0
        %469 = vmatmul.mubr.f32.gmra.mrb[0].mxu0 %v399
        %v470 = vpop.f32.mrb[0].mxu0
        %v471 = vadd.f32 %v395, %v470
        %v472 = vpop.f32.mrb[0].mxu0
        %473 = vmatprep.mubr.f32.mxu0 0.0
        %474 = vmatmul.mubr.f32.gmra.mrb[0].mxu0 %v402
        %v475 = vpop.f32.mrb[0].mxu0
        %v476 = vadd.f32 %v395, %v475
        %v477 = vpop.f32.mrb[0].mxu0
        %478 = vdwg.mxu0
        %v479 = vld [vmem:[#allocation7] sm:$0xff]
        %v480 = vld [vmem:[#allocation7 + $0x8] sm:$0xff]
        %v481 = vld [vmem:[#allocation7 + $0x10] sm:$0xff]
        %v482 = vld [vmem:[#allocation7 + $0x18] sm:$0xff]
        %v483 = vld [vmem:[%s5] sm:$0x1]
        %v485 = vlaneseq
        %v486 = vshrl.u32 %v485, 7
        %v487 = vsub.s32 0, %v486
        %v488 = vrot.slane %v483, %v487
        %490 = vmatprep.subr.mxu0 0.0
        %491 = vmatpush1.msra.mxu0 %v479
        %492 = vmatprep.subr.mxu0 0.0
        %493 = vmatpush1.msra.mxu0 %v480
        %494 = vmatprep.subr.mxu0 0.0
        %495 = vmatpush1.msra.mxu0 %v481
        %496 = vmatprep.subr.mxu0 0.0
        %497 = vmatpush1.msra.mxu0 %v482
        %498 = vmatprep.subr.mxu0 0.0
        %499 = vmatpush1.msra.mxu0 0.0
        %500 = vmatprep.subr.mxu0 0.0
        %501 = vmatpush1.msra.mxu0 0.0
        %502 = vmatprep.subr.mxu0 0.0
        %503 = vmatpush1.msra.mxu0 0.0
        %504 = vmatprep.subr.mxu0 0.0
        %505 = vmatpush1.msra.mxu0 0.0
        %506 = vmatprep.subr.mxu0 0.0
        %507 = vmatpush1.msra.mxu0 0.0
        %508 = vmatprep.subr.mxu0 0.0
        %509 = vmatpush1.msra.mxu0 0.0
        %510 = vmatprep.subr.mxu0 0.0
        %511 = vmatpush1.msra.mxu0 0.0
        %512 = vmatprep.subr.mxu0 0.0
        %513 = vmatpush1.msra.mxu0 0.0
        %514 = vmatprep.subr.mxu0 0.0
        %515 = vmatpush1.msra.mxu0 0.0
        %516 = vmatprep.subr.mxu0 0.0
        %517 = vmatpush1.msra.mxu0 0.0
        %518 = vmatprep.subr.mxu0 0.0
        %519 = vmatpush1.msra.mxu0 0.0
        %520 = vmatprep.subr.mxu0 0.0
        %521 = vmatpush1.msra.mxu0 0.0
        %522 = vmatprep.subr.mxu0 0.0
        %523 = vmatpush1.msra.mxu0 0.0
        %524 = vmatprep.subr.mxu0 0.0
        %525 = vmatpush1.msra.mxu0 0.0
        %526 = vmatprep.subr.mxu0 0.0
        %527 = vmatpush1.msra.mxu0 0.0
        %528 = vmatprep.subr.mxu0 0.0
        %529 = vmatpush1.msra.mxu0 0.0
        %530 = vmatprep.subr.mxu0 0.0
        %531 = vmatpush1.msra.mxu0 0.0
        %532 = vmatprep.subr.mxu0 0.0
        %533 = vmatpush1.msra.mxu0 0.0
        %534 = vmatprep.subr.mxu0 0.0
        %535 = vmatpush1.msra.mxu0 0.0
        %536 = vmatprep.subr.mxu0 0.0
        %537 = vmatpush1.msra.mxu0 0.0
        %538 = vmatprep.subr.mxu0 0.0
        %539 = vmatpush1.msra.mxu0 0.0
        %540 = vmatprep.subr.mxu0 0.0
        %541 = vmatpush1.msra.mxu0 0.0
        %542 = vmatprep.subr.mxu0 0.0
        %543 = vmatpush1.msra.mxu0 0.0
        %544 = vmatprep.subr.mxu0 0.0
        %545 = vmatpush1.msra.mxu0 0.0
        %546 = vmatprep.subr.mxu0 0.0
        %547 = vmatpush1.msra.mxu0 0.0
        %548 = vmatprep.subr.mxu0 0.0
        %549 = vmatpush1.msra.mxu0 0.0
        %550 = vmatprep.subr.mxu0 0.0
        %551 = vmatpush1.msra.mxu0 0.0
        %552 = vmatprep.subr.mxu0 0.0
        %553 = vmatpush1.msra.mxu0 0.0
        %554 = vmatprep.mubr.f32.mxu0 0.0
        %555 = vmatmul.mubr.f32.gmra.mrb[0].mxu0 %v399
        %v556 = vpop.f32.mrb[0].mxu0
        %v557 = vadd.f32 %v488, %v556
        %v558 = vpop.f32.mrb[0].mxu0
        %559 = vmatprep.mubr.f32.mxu0 0.0
        %560 = vmatmul.mubr.f32.gmra.mrb[0].mxu0 %v402
        %v561 = vpop.f32.mrb[0].mxu0
        %v562 = vadd.f32 %v488, %v561
        %v563 = vpop.f32.mrb[0].mxu0
        %564 = vdwg.mxu0
        %v565 = vld [vmem:[#allocation8] sm:$0xff]
        %v566 = vld [vmem:[#allocation8 + $0x8] sm:$0xff]
        %v567 = vld [vmem:[#allocation8 + $0x10] sm:$0xff]
        %v568 = vld [vmem:[#allocation8 + $0x18] sm:$0xff]
        %v569 = vld [vmem:[%s6] sm:$0x1]
        %v571 = vlaneseq
        %v572 = vshrl.u32 %v571, 7
        %v573 = vsub.s32 0, %v572
        %v574 = vrot.slane %v569, %v573
        %576 = vmatprep.subr.mxu0 0.0
        %577 = vmatpush1.msra.mxu0 %v565
        %578 = vmatprep.subr.mxu0 0.0
        %579 = vmatpush1.msra.mxu0 %v566
        %580 = vmatprep.subr.mxu0 0.0
        %581 = vmatpush1.msra.mxu0 %v567
        %582 = vmatprep.subr.mxu0 0.0
        %583 = vmatpush1.msra.mxu0 %v568
        %584 = vmatprep.subr.mxu0 0.0
        %585 = vmatpush1.msra.mxu0 0.0
        %586 = vmatprep.subr.mxu0 0.0
        %587 = vmatpush1.msra.mxu0 0.0
        %588 = vmatprep.subr.mxu0 0.0
        %589 = vmatpush1.msra.mxu0 0.0
        %590 = vmatprep.subr.mxu0 0.0
        %591 = vmatpush1.msra.mxu0 0.0
        %592 = vmatprep.subr.mxu0 0.0
        %593 = vmatpush1.msra.mxu0 0.0
        %594 = vmatprep.subr.mxu0 0.0
        %595 = vmatpush1.msra.mxu0 0.0
        %596 = vmatprep.subr.mxu0 0.0
        %597 = vmatpush1.msra.mxu0 0.0
        %598 = vmatprep.subr.mxu0 0.0
        %599 = vmatpush1.msra.mxu0 0.0
        %600 = vmatprep.subr.mxu0 0.0
        %601 = vmatpush1.msra.mxu0 0.0
        %602 = vmatprep.subr.mxu0 0.0
        %603 = vmatpush1.msra.mxu0 0.0
        %604 = vmatprep.subr.mxu0 0.0
        %605 = vmatpush1.msra.mxu0 0.0
        %606 = vmatprep.subr.mxu0 0.0
        %607 = vmatpush1.msra.mxu0 0.0
        %608 = vmatprep.subr.mxu0 0.0
        %609 = vmatpush1.msra.mxu0 0.0
        %610 = vmatprep.subr.mxu0 0.0
        %611 = vmatpush1.msra.mxu0 0.0
        %612 = vmatprep.subr.mxu0 0.0
        %613 = vmatpush1.msra.mxu0 0.0
        %614 = vmatprep.subr.mxu0 0.0
        %615 = vmatpush1.msra.mxu0 0.0
        %616 = vmatprep.subr.mxu0 0.0
        %617 = vmatpush1.msra.mxu0 0.0
        %618 = vmatprep.subr.mxu0 0.0
        %619 = vmatpush1.msra.mxu0 0.0
        %620 = vmatprep.subr.mxu0 0.0
        %621 = vmatpush1.msra.mxu0 0.0
        %622 = vmatprep.subr.mxu0 0.0
        %623 = vmatpush1.msra.mxu0 0.0
        %624 = vmatprep.subr.mxu0 0.0
        %625 = vmatpush1.msra.mxu0 0.0
        %626 = vmatprep.subr.mxu0 0.0
        %627 = vmatpush1.msra.mxu0 0.0
        %628 = vmatprep.subr.mxu0 0.0
        %629 = vmatpush1.msra.mxu0 0.0
        %630 = vmatprep.subr.mxu0 0.0
        %631 = vmatpush1.msra.mxu0 0.0
        %632 = vmatprep.subr.mxu0 0.0
        %633 = vmatpush1.msra.mxu0 0.0
        %634 = vmatprep.subr.mxu0 0.0
        %635 = vmatpush1.msra.mxu0 0.0
        %636 = vmatprep.subr.mxu0 0.0
        %637 = vmatpush1.msra.mxu0 0.0
        %638 = vmatprep.subr.mxu0 0.0
        %639 = vmatpush1.msra.mxu0 0.0
        %640 = vmatprep.mubr.f32.mxu0 0.0
        %641 = vmatmul.mubr.f32.gmra.mrb[0].mxu0 %v399
        %v642 = vpop.f32.mrb[0].mxu0
        %v643 = vadd.f32 %v574, %v642
        %v644 = vpop.f32.mrb[0].mxu0
        %645 = vmatprep.mubr.f32.mxu0 0.0
        %646 = vmatmul.mubr.f32.gmra.mrb[0].mxu0 %v402
        %v647 = vpop.f32.mrb[0].mxu0
        %v648 = vadd.f32 %v574, %v647
        %v649 = vpop.f32.mrb[0].mxu0
        %650 = vdwg.mxu0
        %653 = vrot.lane.b32.xlu0 %v471, 112
        %v654 = vpop.permute.xlu0 %653
        %655 = vrot.lane.b32.xlu0 %v476, 112
        %v656 = vpop.permute.xlu0 %655
        %659 = vrot.lane.b32.xlu0 %v557, 112
        %v660 = vpop.permute.xlu0 %659
        %661 = vrot.lane.b32.xlu0 %v562, 112
        %v662 = vpop.permute.xlu0 %661
        %665 = vrot.lane.b32.xlu0 %v643, 112
        %v666 = vpop.permute.xlu0 %665
        %667 = vrot.lane.b32.xlu0 %v648, 112
        %v668 = vpop.permute.xlu0 %667
        %vm671 = vcmask 130048
        %v672 = vsel %vm671, %v471, 0
        %v674 = vsel %vm671, %v476, 0
        %v676 = vsel %vm671, %v557, 0
        %v678 = vsel %vm671, %v562, 0
        %680 = vmatprep.subr.mxu0 0.0
        %681 = vmatpush1.xpose.msra.mxu0 %v676
        %682 = vmatprep.subr.mxu0 0.0
        %683 = vmatpush1.xpose.msra.mxu0 %v678
        %684 = vmatprep.subr.mxu0 0.0
        %685 = vmatpush1.xpose.msra.mxu0 0.0
        %686 = vmatprep.subr.mxu0 0.0
        %687 = vmatpush1.xpose.msra.mxu0 0.0
        %688 = vmatprep.subr.mxu0 0.0
        %689 = vmatpush1.xpose.msra.mxu0 0.0
        %690 = vmatprep.subr.mxu0 0.0
        %691 = vmatpush1.xpose.msra.mxu0 0.0
        %692 = vmatprep.subr.mxu0 0.0
        %693 = vmatpush1.xpose.msra.mxu0 0.0
        %694 = vmatprep.subr.mxu0 0.0
        %695 = vmatpush1.xpose.msra.mxu0 0.0
        %696 = vmatprep.subr.mxu0 0.0
        %697 = vmatpush1.xpose.msra.mxu0 0.0
        %698 = vmatprep.subr.mxu0 0.0
        %699 = vmatpush1.xpose.msra.mxu0 0.0
        %700 = vmatprep.subr.mxu0 0.0
        %701 = vmatpush1.xpose.msra.mxu0 0.0
        %702 = vmatprep.subr.mxu0 0.0
        %703 = vmatpush1.xpose.msra.mxu0 0.0
        %704 = vmatprep.subr.mxu0 0.0
        %705 = vmatpush1.xpose.msra.mxu0 0.0
        %706 = vmatprep.subr.mxu0 0.0
        %707 = vmatpush1.xpose.msra.mxu0 0.0
        %708 = vmatprep.subr.mxu0 0.0
        %709 = vmatpush1.xpose.msra.mxu0 0.0
        %710 = vmatprep.subr.mxu0 0.0
        %711 = vmatpush1.xpose.msra.mxu0 0.0
        %712 = vmatprep.subr.mxu0 0.0
        %713 = vmatpush1.xpose.msra.mxu0 0.0
        %714 = vmatprep.subr.mxu0 0.0
        %715 = vmatpush1.xpose.msra.mxu0 0.0
        %716 = vmatprep.subr.mxu0 0.0
        %717 = vmatpush1.xpose.msra.mxu0 0.0
        %718 = vmatprep.subr.mxu0 0.0
        %719 = vmatpush1.xpose.msra.mxu0 0.0
        %720 = vmatprep.subr.mxu0 0.0
        %721 = vmatpush1.xpose.msra.mxu0 0.0
        %722 = vmatprep.subr.mxu0 0.0
        %723 = vmatpush1.xpose.msra.mxu0 0.0
        %724 = vmatprep.subr.mxu0 0.0
        %725 = vmatpush1.xpose.msra.mxu0 0.0
        %726 = vmatprep.subr.mxu0 0.0
        %727 = vmatpush1.xpose.msra.mxu0 0.0
        %728 = vmatprep.subr.mxu0 0.0
        %729 = vmatpush1.xpose.msra.mxu0 0.0
        %730 = vmatprep.subr.mxu0 0.0
        %731 = vmatpush1.xpose.msra.mxu0 0.0
        %732 = vmatprep.subr.mxu0 0.0
        %733 = vmatpush1.xpose.msra.mxu0 0.0
        %734 = vmatprep.subr.mxu0 0.0
        %735 = vmatpush1.xpose.msra.mxu0 0.0
        %736 = vmatprep.subr.mxu0 0.0
        %737 = vmatpush1.xpose.msra.mxu0 0.0
        %738 = vmatprep.subr.mxu0 0.0
        %739 = vmatpush1.xpose.msra.mxu0 0.0
        %740 = vmatprep.subr.mxu0 0.0
        %741 = vmatpush1.xpose.msra.mxu0 0.0
        %742 = vmatprep.subr.mxu0 0.0
        %743 = vmatpush1.xpose.msra.mxu0 0.0
        %744 = vmatprep.mubr.f32.mxu0 0.0
        %745 = vmatmul.mubr.f32.gmra.mrb[0].mxu0 %v672
        %v746 = vpop.f32.mrb[0].mxu0
        %v747 = vadd.f32 0.0, %v746
        %v748 = vpop.f32.mrb[0].mxu0
        %749 = vmatprep.mubr.f32.mxu0 0.0
        %750 = vmatmul.mubr.f32.gmra.mrb[0].mxu0 %v674
        %v751 = vpop.f32.mrb[0].mxu0
        %v752 = vadd.f32 0.0, %v751
        %v753 = vpop.f32.mrb[0].mxu0
        %754 = vdwg.mxu0
        %v755 = vsel %vm671, %v654, 0
        %v757 = vsel %vm671, %v656, 0
        %v759 = vsel %vm671, %v660, 0
        %v761 = vsel %vm671, %v662, 0
        %763 = vmatprep.subr.mxu0 0.0
        %764 = vmatpush1.xpose.msra.mxu0 %v759
        %765 = vmatprep.subr.mxu0 0.0
        %766 = vmatpush1.xpose.msra.mxu0 %v761
        %767 = vmatprep.subr.mxu0 0.0
        %768 = vmatpush1.xpose.msra.mxu0 0.0
        %769 = vmatprep.subr.mxu0 0.0
        %770 = vmatpush1.xpose.msra.mxu0 0.0
        %771 = vmatprep.subr.mxu0 0.0
        %772 = vmatpush1.xpose.msra.mxu0 0.0
        %773 = vmatprep.subr.mxu0 0.0
        %774 = vmatpush1.xpose.msra.mxu0 0.0
        %775 = vmatprep.subr.mxu0 0.0
        %776 = vmatpush1.xpose.msra.mxu0 0.0
        %777 = vmatprep.subr.mxu0 0.0
        %778 = vmatpush1.xpose.msra.mxu0 0.0
        %779 = vmatprep.subr.mxu0 0.0
        %780 = vmatpush1.xpose.msra.mxu0 0.0
        %781 = vmatprep.subr.mxu0 0.0
        %782 = vmatpush1.xpose.msra.mxu0 0.0
        %783 = vmatprep.subr.mxu0 0.0
        %784 = vmatpush1.xpose.msra.mxu0 0.0
        %785 = vmatprep.subr.mxu0 0.0
        %786 = vmatpush1.xpose.msra.mxu0 0.0
        %787 = vmatprep.subr.mxu0 0.0
        %788 = vmatpush1.xpose.msra.mxu0 0.0
        %789 = vmatprep.subr.mxu0 0.0
        %790 = vmatpush1.xpose.msra.mxu0 0.0
        %791 = vmatprep.subr.mxu0 0.0
        %792 = vmatpush1.xpose.msra.mxu0 0.0
        %793 = vmatprep.subr.mxu0 0.0
        %794 = vmatpush1.xpose.msra.mxu0 0.0
        %795 = vmatprep.subr.mxu0 0.0
        %796 = vmatpush1.xpose.msra.mxu0 0.0
        %797 = vmatprep.subr.mxu0 0.0
        %798 = vmatpush1.xpose.msra.mxu0 0.0
        %799 = vmatprep.subr.mxu0 0.0
        %800 = vmatpush1.xpose.msra.mxu0 0.0
        %801 = vmatprep.subr.mxu0 0.0
        %802 = vmatpush1.xpose.msra.mxu0 0.0
        %803 = vmatprep.subr.mxu0 0.0
        %804 = vmatpush1.xpose.msra.mxu0 0.0
        %805 = vmatprep.subr.mxu0 0.0
        %806 = vmatpush1.xpose.msra.mxu0 0.0
        %807 = vmatprep.subr.mxu0 0.0
        %808 = vmatpush1.xpose.msra.mxu0 0.0
        %809 = vmatprep.subr.mxu0 0.0
        %810 = vmatpush1.xpose.msra.mxu0 0.0
        %811 = vmatprep.subr.mxu0 0.0
        %812 = vmatpush1.xpose.msra.mxu0 0.0
        %813 = vmatprep.subr.mxu0 0.0
        %814 = vmatpush1.xpose.msra.mxu0 0.0
        %815 = vmatprep.subr.mxu0 0.0
        %816 = vmatpush1.xpose.msra.mxu0 0.0
        %817 = vmatprep.subr.mxu0 0.0
        %818 = vmatpush1.xpose.msra.mxu0 0.0
        %819 = vmatprep.subr.mxu0 0.0
        %820 = vmatpush1.xpose.msra.mxu0 0.0
        %821 = vmatprep.subr.mxu0 0.0
        %822 = vmatpush1.xpose.msra.mxu0 0.0
        %823 = vmatprep.subr.mxu0 0.0
        %824 = vmatpush1.xpose.msra.mxu0 0.0
        %825 = vmatprep.subr.mxu0 0.0
        %826 = vmatpush1.xpose.msra.mxu0 0.0
        %827 = vmatprep.mubr.f32.mxu0 0.0
        %828 = vmatmul.mubr.f32.gmra.mrb[0].mxu0 %v755
        %v829 = vpop.f32.mrb[0].mxu0
        %v830 = vadd.f32 0.0, %v829
        %v831 = vpop.f32.mrb[0].mxu0
        %832 = vmatprep.mubr.f32.mxu0 0.0
        %833 = vmatmul.mubr.f32.gmra.mrb[0].mxu0 %v757
        %v834 = vpop.f32.mrb[0].mxu0
        %v835 = vadd.f32 0.0, %v834
        %v836 = vpop.f32.mrb[0].mxu0
        %837 = vdwg.mxu0
        %v838 = vld [vmem:[#allocation10] sm:$0xff]
        %v839 = vld [vmem:[#allocation10 + $0x8] sm:$0xff]
        %v840 = vld [vmem:[#allocation10 + $0x10] sm:$0xff]
        %v841 = vld [vmem:[#allocation10 + $0x18] sm:$0xff]
        %v842 = vadd.f32 %v747, %v838
        %v843 = vadd.f32 %v752, %v839
        %v844 = vadd.f32 %v830, %v840
        %v845 = vadd.f32 %v835, %v841
        %v846 = vsel %vm671, %v842, -inf
        %847 = vmax.xlane.f32.xlu0 %v846
        %v848 = vpop.xlane.xlu0 %847
        %v849 = vsel %vm671, %v843, -inf
        %850 = vmax.xlane.f32.xlu0 %v849
        %v851 = vpop.xlane.xlu0 %850
        %v852 = vsel %vm671, %v844, -inf
        %853 = vmax.xlane.f32.xlu0 %v852
        %v854 = vpop.xlane.xlu0 %853
        %v855 = vsel %vm671, %v845, -inf
        %856 = vmax.xlane.f32.xlu0 %v855
        %v857 = vpop.xlane.xlu0 %856
        %v858 = vsub.f32 %v842, %v848
        %v859 = vsub.f32 %v843, %v851
        %v860 = vsub.f32 %v844, %v854
        %v861 = vsub.f32 %v845, %v857
        %v862 = vmul.f32 %v858, 1.442695
        %v863 = vpow.pop %v862
        %v864 = vmul.f32 %v859, 1.442695
        %v865 = vpow.pop %v864
        %v866 = vmul.f32 %v860, 1.442695
        %v867 = vpow.pop %v866
        %v868 = vmul.f32 %v861, 1.442695
        %v869 = vpow.pop %v868
        %v870 = vsel %vm671, %v863, 0.0
        %871 = vadd.xlane.f32.xlu0 %v870
        %v872 = vpop.xlane.xlu0 %871
        %v873 = vsel %vm671, %v865, 0.0
        %874 = vadd.xlane.f32.xlu0 %v873
        %v875 = vpop.xlane.xlu0 %874
        %v876 = vsel %vm671, %v867, 0.0
        %877 = vadd.xlane.f32.xlu0 %v876
        %v878 = vpop.xlane.xlu0 %877
        %v879 = vsel %vm671, %v869, 0.0
        %880 = vadd.xlane.f32.xlu0 %v879
        %v881 = vpop.xlane.xlu0 %880
        %v883 = vsel %vm671, %v863, 0
        %v886 = vsel %vm671, %v865, 0
        %888 = vmatprep.subr.mxu0 0.0
        %889 = vmatpush1.msra.mxu0 %v643
        %890 = vmatprep.subr.mxu0 0.0
        %891 = vmatpush1.msra.mxu0 %v648
        %892 = vmatprep.subr.mxu0 0.0
        %893 = vmatpush1.msra.mxu0 0.0
        %894 = vmatprep.subr.mxu0 0.0
        %895 = vmatpush1.msra.mxu0 0.0
        %896 = vmatprep.subr.mxu0 0.0
        %897 = vmatpush1.msra.mxu0 0.0
        %898 = vmatprep.subr.mxu0 0.0
        %899 = vmatpush1.msra.mxu0 0.0
        %900 = vmatprep.subr.mxu0 0.0
        %901 = vmatpush1.msra.mxu0 0.0
        %902 = vmatprep.subr.mxu0 0.0
        %903 = vmatpush1.msra.mxu0 0.0
        %904 = vmatprep.subr.mxu0 0.0
        %905 = vmatpush1.msra.mxu0 0.0
        %906 = vmatprep.subr.mxu0 0.0
        %907 = vmatpush1.msra.mxu0 0.0
        %908 = vmatprep.subr.mxu0 0.0
        %909 = vmatpush1.msra.mxu0 0.0
        %910 = vmatprep.subr.mxu0 0.0
        %911 = vmatpush1.msra.mxu0 0.0
        %912 = vmatprep.subr.mxu0 0.0
        %913 = vmatpush1.msra.mxu0 0.0
        %914 = vmatprep.subr.mxu0 0.0
        %915 = vmatpush1.msra.mxu0 0.0
        %916 = vmatprep.subr.mxu0 0.0
        %917 = vmatpush1.msra.mxu0 0.0
        %918 = vmatprep.subr.mxu0 0.0
        %919 = vmatpush1.msra.mxu0 0.0
        %920 = vmatprep.subr.mxu0 0.0
        %921 = vmatpush1.msra.mxu0 0.0
        %922 = vmatprep.subr.mxu0 0.0
        %923 = vmatpush1.msra.mxu0 0.0
        %924 = vmatprep.subr.mxu0 0.0
        %925 = vmatpush1.msra.mxu0 0.0
        %926 = vmatprep.subr.mxu0 0.0
        %927 = vmatpush1.msra.mxu0 0.0
        %928 = vmatprep.subr.mxu0 0.0
        %929 = vmatpush1.msra.mxu0 0.0
        %930 = vmatprep.subr.mxu0 0.0
        %931 = vmatpush1.msra.mxu0 0.0
        %932 = vmatprep.subr.mxu0 0.0
        %933 = vmatpush1.msra.mxu0 0.0
        %934 = vmatprep.subr.mxu0 0.0
        %935 = vmatpush1.msra.mxu0 0.0
        %936 = vmatprep.subr.mxu0 0.0
        %937 = vmatpush1.msra.mxu0 0.0
        %938 = vmatprep.subr.mxu0 0.0
        %939 = vmatpush1.msra.mxu0 0.0
        %940 = vmatprep.subr.mxu0 0.0
        %941 = vmatpush1.msra.mxu0 0.0
        %942 = vmatprep.subr.mxu0 0.0
        %943 = vmatpush1.msra.mxu0 0.0
        %944 = vmatprep.subr.mxu0 0.0
        %945 = vmatpush1.msra.mxu0 0.0
        %946 = vmatprep.subr.mxu0 0.0
        %947 = vmatpush1.msra.mxu0 0.0
        %948 = vmatprep.subr.mxu0 0.0
        %949 = vmatpush1.msra.mxu0 0.0
        %950 = vmatprep.subr.mxu0 0.0
        %951 = vmatpush1.msra.mxu0 0.0
        %952 = vmatprep.mubr.f32.mxu0 0.0
        %953 = vmatmul.mubr.f32.gmra.mrb[0].mxu0 %v883
        %v954 = vpop.f32.mrb[0].mxu0
        %v955 = vadd.f32 0.0, %v954
        %v956 = vpop.f32.mrb[0].mxu0
        %957 = vmatprep.mubr.f32.mxu0 0.0
        %958 = vmatmul.mubr.f32.gmra.mrb[0].mxu0 %v886
        %v959 = vpop.f32.mrb[0].mxu0
        %v960 = vadd.f32 0.0, %v959
        %v961 = vpop.f32.mrb[0].mxu0
        %962 = vdwg.mxu0
        %v964 = vsel %vm671, %v867, 0
        %v967 = vsel %vm671, %v869, 0
        %969 = vmatprep.subr.mxu0 0.0
        %970 = vmatpush1.msra.mxu0 %v666
        %971 = vmatprep.subr.mxu0 0.0
        %972 = vmatpush1.msra.mxu0 %v668
        %973 = vmatprep.subr.mxu0 0.0
        %974 = vmatpush1.msra.mxu0 0.0
        %975 = vmatprep.subr.mxu0 0.0
        %976 = vmatpush1.msra.mxu0 0.0
        %977 = vmatprep.subr.mxu0 0.0
        %978 = vmatpush1.msra.mxu0 0.0
        %979 = vmatprep.subr.mxu0 0.0
        %980 = vmatpush1.msra.mxu0 0.0
        %981 = vmatprep.subr.mxu0 0.0
        %982 = vmatpush1.msra.mxu0 0.0
        %983 = vmatprep.subr.mxu0 0.0
        %984 = vmatpush1.msra.mxu0 0.0
        %985 = vmatprep.subr.mxu0 0.0
        %986 = vmatpush1.msra.mxu0 0.0
        %987 = vmatprep.subr.mxu0 0.0
        %988 = vmatpush1.msra.mxu0 0.0
        %989 = vmatprep.subr.mxu0 0.0
        %990 = vmatpush1.msra.mxu0 0.0
        %991 = vmatprep.subr.mxu0 0.0
        %992 = vmatpush1.msra.mxu0 0.0
        %993 = vmatprep.subr.mxu0 0.0
        %994 = vmatpush1.msra.mxu0 0.0
        %995 = vmatprep.subr.mxu0 0.0
        %996 = vmatpush1.msra.mxu0 0.0
        %997 = vmatprep.subr.mxu0 0.0
        %998 = vmatpush1.msra.mxu0 0.0
        %999 = vmatprep.subr.mxu0 0.0
        %1000 = vmatpush1.msra.mxu0 0.0
        %1001 = vmatprep.subr.mxu0 0.0
        %1002 = vmatpush1.msra.mxu0 0.0
        %1003 = vmatprep.subr.mxu0 0.0
        %1004 = vmatpush1.msra.mxu0 0.0
        %1005 = vmatprep.subr.mxu0 0.0
        %1006 = vmatpush1.msra.mxu0 0.0
        %1007 = vmatprep.subr.mxu0 0.0
        %1008 = vmatpush1.msra.mxu0 0.0
        %1009 = vmatprep.subr.mxu0 0.0
        %1010 = vmatpush1.msra.mxu0 0.0
        %1011 = vmatprep.subr.mxu0 0.0
        %1012 = vmatpush1.msra.mxu0 0.0
        %1013 = vmatprep.subr.mxu0 0.0
        %1014 = vmatpush1.msra.mxu0 0.0
        %1015 = vmatprep.subr.mxu0 0.0
        %1016 = vmatpush1.msra.mxu0 0.0
        %1017 = vmatprep.subr.mxu0 0.0
        %1018 = vmatpush1.msra.mxu0 0.0
        %1019 = vmatprep.subr.mxu0 0.0
        %1020 = vmatpush1.msra.mxu0 0.0
        %1021 = vmatprep.subr.mxu0 0.0
        %1022 = vmatpush1.msra.mxu0 0.0
        %1023 = vmatprep.subr.mxu0 0.0
        %1024 = vmatpush1.msra.mxu0 0.0
        %1025 = vmatprep.subr.mxu0 0.0
        %1026 = vmatpush1.msra.mxu0 0.0
        %1027 = vmatprep.subr.mxu0 0.0
        %1028 = vmatpush1.msra.mxu0 0.0
        %1029 = vmatprep.subr.mxu0 0.0
        %1030 = vmatpush1.msra.mxu0 0.0
        %1031 = vmatprep.subr.mxu0 0.0
        %1032 = vmatpush1.msra.mxu0 0.0
        %1033 = vmatprep.mubr.f32.mxu0 0.0
        %1034 = vmatmul.mubr.f32.gmra.mrb[0].mxu0 %v964
        %v1035 = vpop.f32.mrb[0].mxu0
        %v1036 = vadd.f32 0.0, %v1035
        %v1037 = vpop.f32.mrb[0].mxu0
        %1038 = vmatprep.mubr.f32.mxu0 0.0
        %1039 = vmatmul.mubr.f32.gmra.mrb[0].mxu0 %v967
        %v1040 = vpop.f32.mrb[0].mxu0
        %v1041 = vadd.f32 0.0, %v1040
        %v1042 = vpop.f32.mrb[0].mxu0
        %1043 = vdwg.mxu0
        %v1044 = vrcp.pop %v872
        %v1045 = vrcp.pop %v875
        %v1046 = vrcp.pop %v878
        %v1047 = vrcp.pop %v881
        %v1048 = vmul.f32 %v955, %v1044
        %v1049 = vmul.f32 %v960, %v1045
        %v1050 = vmul.f32 %v1036, %v1046
        %v1051 = vmul.f32 %v1041, %v1047
        %1054 = vrot.lane.b32.xlu0 %v1050, 16
        %v1055 = vpop.permute.xlu0 %1054
        %1056 = vrot.lane.b32.xlu0 %v1051, 16
        %v1057 = vpop.permute.xlu0 %1056
        %v1060 = vsel %vm671, %v1048, %v1055
        %v1061 = vsel %vm671, %v1049, %v1057
        %1062 = vst.msk [vmem:[%s381] sm:$0xff] %vm397, %v1060
        %1063 = vst.msk [vmem:[%s381 + $0x8] sm:$0xff] %vm397, %v1061
        %s1064 = sand.u32 %s208, 1
        %s1065 = scalar_lea.sflag [#allocation4], %s1064
        %s1066 = sand.u32 %s208, 1
        %s1067 = smul.addr %s1066, 16
        %s1068 = scalar_lea.vmem [#allocation11], %s1067
        // Predicated region
        $region73: #{tpu_custom_call.1} parent=51 // pred_check
          %p1069 = pneg %p218
        $region74: #{tpu_custom_call.1} parent=51 // pred_check_branch
          %1071 = sbr.rel (%p1069) target = $region76
        $region75: #{tpu_custom_call.1} parent=51 // pred_region
          %s1072 = smul.u32 2, %s27
          %s1074 = ssub.s32 256, 256
          %1075 = vsyncadd %s1065, %s1074
          %s1076 = smul.addr %s1072, 128
          %s1077 = scalar_lea.hbm %s8, %s1076
          %s1078 = sshll.u32 %s1068, 4
          %s1079 = int_to_ptr.vmem [resolvable:$true] %s1078
          %1084 = dma.vmem_to_hbm [thread:$0]  %s1079, 256, %s1077, %s1065, 128, 128, 8
        $region76: #{tpu_custom_call.1} parent=51 // pred_fallthru
          _
      $region52: #{tpu_custom_call.1} parent=5 // pred_fallthru
        _
      %p1085 = scmp.le.s32.totalorder 2, %s22
      // Predicated region
      $region77: #{tpu_custom_call.1} parent=5 // pred_check
        %p1086 = pneg %p1085
      $region78: #{tpu_custom_call.1} parent=5 // pred_check_branch
        %1088 = sbr.rel (%p1086) target = $region80
      $region79: #{tpu_custom_call.1} parent=5 // pred_region
        %s1089 = ssub.s32 %s22, 2
        // Predicated region
        $region81: #{tpu_custom_call.1} parent=79 // pred_check
          %p1090 = pneg %p224
        $region82: #{tpu_custom_call.1} parent=79 // pred_check_branch
          %1092 = sbr.rel (%p1090) target = $region84
        $region83: #{tpu_custom_call.1} parent=79 // pred_region
          %s1093 = sand.u32 %s209, 1
          %s1094 = scalar_lea.sflag [#allocation4], %s1093
          %s1095 = sand.u32 %s209, 1
          %s1096 = smul.addr %s1095, 16
          %s1097 = scalar_lea.vmem [#allocation11], %s1096
          %1098 = dma.done %s1094, 256
        $region84: #{tpu_custom_call.1} parent=79 // pred_fallthru
          _
      $region80: #{tpu_custom_call.1} parent=5 // pred_fallthru
        _
    $region6: #{tpu_custom_call.1} parent=1 // loop_footer
      %s26 = sadd.s32 1, %s22
    $region7: #{tpu_custom_call.1} parent=1 // loop_footer_branch
      %21 = sbr.rel target = $region3
    $region8: #{tpu_custom_call.1} parent=1 // loop_exit
      _
    %1099 = vsyncpa [#allocation3], 1
    %s1100 = scalar_lea.sflag [#allocation3], 1
    %1101 = vsyncpa %s1100, 1
    %1102 = vsyncpa [#allocation6], 1
    %1103 = vsyncpa [#allocation9], 1
    %1104 = vsyncpa [#allocation4], 1
    %s1105 = scalar_lea.sflag [#allocation4], 1
    %1106 = vsyncpa %s1105, 1

</llo_original>
